<compile_context>
chip_gen: v7x
topology: tpu7x:2x2x1
jax: 0.10.0
libtpu: 0.0.40
codegen_flags: <defaults>
</compile_context>

<pallas_src>
import jax
import jax.numpy as jnp
from jax.experimental import pallas as pl
from jax.experimental.pallas import tpu as pltpu

NUM_INP = 13
NUM_HIDDEN = 64
NUM_DIM_MLP = 16
OUT_LANES = 128   # head output padded to a full lane tile for unmasked stores


# ----------------------------------------------------------------------------
# Kernel
# ----------------------------------------------------------------------------
def ts_rnn_kernel(x_ref,                        # (seq, B_blk, NUM_INP)  time-major
                  wih0_ref,                     # (NUM_INP, 4H) bf16, gate order (f,i,o,g)
                  whh0_ref,                     # (H, 4H)       bf16
                  b0_ref,                       # (1, 4H)       f32   b_ih + b_hh, layer 0
                  wih1_ref,                     # (H, 4H)       bf16
                  whh1_ref,                     # (H, 4H)       bf16
                  b1_ref,                       # (1, 4H)       f32   b_ih + b_hh, layer 1
                  wm1_ref, bm1_ref,             # (H, M) f32, (1, M) f32
                  wm2_ref, bm2_ref,             # (M, 128) f32 (lane-padded), (1, 128) f32
                  out_ref):                     # (B_blk, 128)
    seq, B, num_inp = x_ref.shape
    H = whh0_ref.shape[0]
    bf16 = jnp.bfloat16

    # ---- Hoisted layer-0 input projection: one big matmul over all timesteps,
    # kept time-major so the per-step read is a free leading-axis slice.
    x_flat = x_ref[...].reshape(seq * B, num_inp).astype(bf16)
    xproj = (jnp.dot(x_flat, wih0_ref[...], preferred_element_type=jnp.float32)
             + b0_ref[...])                                   # bias folded once
    xproj = xproj.reshape(seq, B, 4 * H)

    whh0 = whh0_ref[...]
    wih1 = wih1_ref[...]
    whh1 = whh1_ref[...]
    b1 = jnp.broadcast_to(b1_ref[...], (B, 4 * H))            # broadcast hoisted

    def gates_to_hc(g, c):
        # Gate order (f, i, o, g): direct 64-lane slices, sigmoid/tanh on EUP.
        f_g = jax.nn.sigmoid(g[:, 0 * H:1 * H])
        i_g = jax.nn.sigmoid(g[:, 1 * H:2 * H])
        o_g = jax.nn.sigmoid(g[:, 2 * H:3 * H])
        g_g = jnp.tanh(g[:, 3 * H:4 * H])
        c_new = f_g * c + i_g * g_g
        h_new = o_g * jnp.tanh(c_new)
        return h_new, c_new

    h0 = jnp.zeros((B, H), jnp.float32)
    c0 = jnp.zeros((B, H), jnp.float32)
    h1 = jnp.zeros((B, H), jnp.float32)
    c1 = jnp.zeros((B, H), jnp.float32)

    # seq is static & small -> fully unrolled time loop; all slices are static.
    for t in range(seq):
        # Layer 0: input projection already done; only the recurrent matmul
        # remains on the serial critical path.
        g0 = xproj[t] + jnp.dot(h0.astype(bf16), whh0,
                                preferred_element_type=jnp.float32)
        h0, c0 = gates_to_hc(g0, c0)
        # Layer 1: split ih/hh dots (no per-step concat); the hh dot depends
        # only on the previous step's h1, so it can issue early / overlap.
        g1 = (jnp.dot(h0.astype(bf16), wih1, preferred_element_type=jnp.float32)
              + jnp.dot(h1.astype(bf16), whh1, preferred_element_type=jnp.float32)
              + b1)
        h1, c1 = gates_to_hc(g1, c1)

    # MLP head on the last timestep of the top layer (Dropout == identity in
    # eval).  wm2/bm2 are pre-padded to 128 lanes -> unmasked, lane-dense store;
    # column 0 holds the answer, the wrapper slices it out.
    hid = jnp.maximum(
        jnp.dot(h1, wm1_ref[...], preferred_element_type=jnp.float32) + bm1_ref[...],
        0.0)
    out_ref[...] = (jnp.dot(hid, wm2_ref[...], preferred_element_type=jnp.float32)
                    + bm2_ref[...])


# ----------------------------------------------------------------------------
# Parameter handling (PyTorch layout -> kernel layout)
# ----------------------------------------------------------------------------
def _reorder_gates(w_pt):
    """PyTorch packs LSTM gates as (i, f, g, o) along axis 0; kernel wants (f, i, o, g)."""
    i, f, g, o = jnp.split(w_pt, 4, axis=0)
    return jnp.concatenate([f, i, o, g], axis=0)


def prepare_params(pt):
    """Convert PyTorch-layout weights to the kernel's pre-transposed / packed layout."""
    bf16 = jnp.bfloat16
    wih0 = _reorder_gates(pt["weight_ih_l0"]).T.astype(bf16)          # (IN, 4H)
    whh0 = _reorder_gates(pt["weight_hh_l0"]).T.astype(bf16)          # (H, 4H)
    b0 = (_reorder_gates(pt["bias_ih_l0"]) +
          _reorder_gates(pt["bias_hh_l0"]))[None, :].astype(jnp.float32)   # (1, 4H)
    wih1 = _reorder_gates(pt["weight_ih_l1"]).T.astype(bf16)          # (H, 4H)
    whh1 = _reorder_gates(pt["weight_hh_l1"]).T.astype(bf16)          # (H, 4H)
    b1 = (_reorder_gates(pt["bias_ih_l1"]) +
          _reorder_gates(pt["bias_hh_l1"]))[None, :].astype(jnp.float32)   # (1, 4H)
    wm1 = pt["mlp0_weight"].T.astype(jnp.float32)                     # (H, M)
    bm1 = pt["mlp0_bias"][None, :].astype(jnp.float32)                # (1, M)
    # Pad the 1-wide head output to OUT_LANES lanes -> unmasked, lane-dense store.
    wm2 = jnp.zeros((NUM_DIM_MLP, OUT_LANES), jnp.float32).at[:, 0].set(
        pt["mlp3_weight"][0].astype(jnp.float32))                     # (M, 128)
    bm2 = jnp.zeros((1, OUT_LANES), jnp.float32).at[0, 0].set(
        pt["mlp3_bias"][0].astype(jnp.float32))                       # (1, 128)
    return (wih0, whh0, b0, wih1, whh1, b1, wm1, bm1, wm2, bm2)


def init_pytorch_params(key, num_inp=NUM_INP, num_hidden=NUM_HIDDEN,
                        num_dim_mlp=NUM_DIM_MLP):
    """Deterministic synthetic parameters in PyTorch's native layout."""
    ks = jax.random.split(key, 12)

    def u(k, shape, bound):
        return jax.random.uniform(k, shape, jnp.float32, -bound, bound)

    kb = 1.0 / float(num_hidden) ** 0.5
    k1 = 1.0 / float(num_hidden) ** 0.5
    k2 = 1.0 / float(num_dim_mlp) ** 0.5
    return {
        "weight_ih_l0": u(ks[0], (4 * num_hidden, num_inp), kb),
        "weight_hh_l0": u(ks[1], (4 * num_hidden, num_hidden), kb),
        "bias_ih_l0":   u(ks[2], (4 * num_hidden,), kb),
        "bias_hh_l0":   u(ks[3], (4 * num_hidden,), kb),
        "weight_ih_l1": u(ks[4], (4 * num_hidden, num_hidden), kb),
        "weight_hh_l1": u(ks[5], (4 * num_hidden, num_hidden), kb),
        "bias_ih_l1":   u(ks[6], (4 * num_hidden,), kb),
        "bias_hh_l1":   u(ks[7], (4 * num_hidden,), kb),
        "mlp0_weight":  u(ks[8], (num_dim_mlp, num_hidden), k1),
        "mlp0_bias":    u(ks[9], (num_dim_mlp,), k1),
        "mlp3_weight":  u(ks[10], (1, num_dim_mlp), k2),
        "mlp3_bias":    u(ks[11], (1,), k2),
    }


# ----------------------------------------------------------------------------
# Wrapper
# ----------------------------------------------------------------------------
def _round_up(x, m):
    return (x + m - 1) // m * m


def _pick_block(batch):
    """Rows per grid block.

    batch <= 8: a single sublane-tile block.  Otherwise split into >= 2 blocks
    (one per TensorCore on v7x via dimension_semantics=("parallel",)), capped
    at 128 rows/block to bound vreg pressure in the fully-unrolled time loop
    (important on v5e, which has a single vector-store slot).
    """
    if batch <= 8:
        return 8
    blk = _round_up((batch + 1) // 2, 8)
    return min(blk, 128)


@jax.jit
def ts_rnn_forward(inp, params):
    """inp: (batch, seq, num_inp) -> (batch, 1), matching TS_rnn.forward (eval mode)."""
    batch, seq, num_inp = inp.shape
    # Time-major (matches the module's transpose(inp, 0, 1)); lets the kernel
    # slice the hoisted input projection on the leading (free) axis.
    x = jnp.transpose(inp, (1, 0, 2)).astype(jnp.float32)     # (seq, batch, IN)

    b_blk = _pick_block(batch)
    padded = _round_up(batch, b_blk)
    if padded != batch:
        x = jnp.pad(x, ((0, 0), (0, padded - batch), (0, 0)))
    nb = padded // b_blk

    def rep(a):  # full-array block, same block index every grid step (grid-resident)
        return pl.BlockSpec(a.shape, lambda i, _nd=a.ndim: (0,) * _nd)

    out = pl.pallas_call(
        ts_rnn_kernel,
        out_shape=jax.ShapeDtypeStruct((padded, OUT_LANES), jnp.float32),
        grid=(nb,),
        in_specs=[pl.BlockSpec((seq, b_blk, num_inp), lambda i: (0, i, 0))]
                 + [rep(w) for w in params],
        out_specs=pl.BlockSpec((b_blk, OUT_LANES), lambda i: (i, 0)),
        compiler_params=pltpu.CompilerParams(
            dimension_semantics=("parallel",)),
    )(x, *params)
    return out[:batch, :1]


# ----------------------------------------------------------------------------
# Pure-JAX reference (PyTorch-layout weights, gate order i,f,g,o)
# ----------------------------------------------------------------------------
def ts_rnn_reference(inp, pt):
    hp = jax.lax.Precision.HIGHEST
    x = jnp.transpose(inp, (1, 0, 2)).astype(jnp.float32)   # (seq, B, IN)

    def lstm_layer(xs, wih, whh, bih, bhh):
        H = whh.shape[1]
        B = xs.shape[1]

        def cell(carry, x_t):
            h, c = carry
            g = (jnp.dot(x_t, wih.T, precision=hp) + bih
                 + jnp.dot(h, whh.T, precision=hp) + bhh)
            i = jax.nn.sigmoid(g[:, 0 * H:1 * H])
            f = jax.nn.sigmoid(g[:, 1 * H:2 * H])
            gg = jnp.tanh(g[:, 2 * H:3 * H])
            o = jax.nn.sigmoid(g[:, 3 * H:4 * H])
            c = f * c + i * gg
            h = o * jnp.tanh(c)
            return (h, c), h

        init = (jnp.zeros((B, H), jnp.float32), jnp.zeros((B, H), jnp.float32))
        _, hs = jax.lax.scan(cell, init, xs)
        return hs

    h0s = lstm_layer(x, pt["weight_ih_l0"], pt["weight_hh_l0"],
                     pt["bias_ih_l0"], pt["bias_hh_l0"])
    h1s = lstm_layer(h0s, pt["weight_ih_l1"], pt["weight_hh_l1"],
                     pt["bias_ih_l1"], pt["bias_hh_l1"])
    h_last = h1s[-1]
    hid = jnp.maximum(
        jnp.dot(h_last, pt["mlp0_weight"].T, precision=hp) + pt["mlp0_bias"], 0.0)
    return jnp.dot(hid, pt["mlp3_weight"].T, precision=hp) + pt["mlp3_bias"]


if __name__ == "__main__":
    key = jax.random.PRNGKey(0)
    k_params, k_x = jax.random.split(key)

    batch, seq = 2, 8
    pt_params = init_pytorch_params(k_params)
    params = tuple(jax.device_put(p) for p in prepare_params(pt_params))
    inp = jax.random.normal(k_x, (batch, seq, NUM_INP), jnp.float32)

    out = ts_rnn_forward(inp, params)
    out = jax.block_until_ready(out)
    assert out.shape == (batch, 1), out.shape

    ref = jax.block_until_ready(ts_rnn_reference(inp, pt_params))
    max_err = float(jnp.max(jnp.abs(out - ref)))
    # bf16 matmul operands with f32 accumulation in the LSTM -> slightly looser
    # tolerance than a pure-f32 comparison.
    assert max_err < 2e-2, f"mismatch vs reference: {max_err}"

    print("KERNEL_OK")
</pallas_src>

<mosaic_0001>
module attributes {stable_mosaic.version = 11 : i64} {
  func.func @ts_rnn_kernel(%arg0: i32, %arg1: memref<8x8x13xf32, #tpu.memory_space<vmem>>, %arg2: memref<13x256xbf16, #tpu.memory_space<vmem>>, %arg3: memref<64x256xbf16, #tpu.memory_space<vmem>>, %arg4: memref<1x256xf32, #tpu.memory_space<vmem>>, %arg5: memref<64x256xbf16, #tpu.memory_space<vmem>>, %arg6: memref<64x256xbf16, #tpu.memory_space<vmem>>, %arg7: memref<1x256xf32, #tpu.memory_space<vmem>>, %arg8: memref<64x16xf32, #tpu.memory_space<vmem>>, %arg9: memref<1x16xf32, #tpu.memory_space<vmem>>, %arg10: memref<16x128xf32, #tpu.memory_space<vmem>>, %arg11: memref<1x128xf32, #tpu.memory_space<vmem>>, %arg12: memref<8x128xf32, #tpu.memory_space<vmem>>) attributes {dimension_semantics = [#tpu.dimension_semantics<parallel>], iteration_bounds = array<i64: 1>, scalar_prefetch = 0 : i64, scratch_operands = 0 : i64, tpu.core_type = #tpu.core_type<tc>, window_params = [{transform_indices = @transform_0, window_bounds = array<i64: 8, 8, 13>}, {pipeline_mode = #tpu.pipeline_mode<synchronous>, transform_indices = @transform_1, window_bounds = array<i64: 13, 256>}, {pipeline_mode = #tpu.pipeline_mode<synchronous>, transform_indices = @transform_2, window_bounds = array<i64: 64, 256>}, {pipeline_mode = #tpu.pipeline_mode<synchronous>, transform_indices = @transform_3, window_bounds = array<i64: 1, 256>}, {pipeline_mode = #tpu.pipeline_mode<synchronous>, transform_indices = @transform_4, window_bounds = array<i64: 64, 256>}, {pipeline_mode = #tpu.pipeline_mode<synchronous>, transform_indices = @transform_5, window_bounds = array<i64: 64, 256>}, {pipeline_mode = #tpu.pipeline_mode<synchronous>, transform_indices = @transform_6, window_bounds = array<i64: 1, 256>}, {pipeline_mode = #tpu.pipeline_mode<synchronous>, transform_indices = @transform_7, window_bounds = array<i64: 64, 16>}, {pipeline_mode = #tpu.pipeline_mode<synchronous>, transform_indices = @transform_8, window_bounds = array<i64: 1, 16>}, {pipeline_mode = #tpu.pipeline_mode<synchronous>, transform_indices = @transform_9, window_bounds = array<i64: 16, 128>}, {pipeline_mode = #tpu.pipeline_mode<synchronous>, transform_indices = @transform_10, window_bounds = array<i64: 1, 128>}, {transform_indices = @transform_11, window_bounds = array<i64: 8, 128>}]} {
    %c0 = arith.constant 0 : index
    %c0_0 = arith.constant 0 : index
    %c0_1 = arith.constant 0 : index
    %0 = vector.load %arg1[%c0, %c0_0, %c0_1] : memref<8x8x13xf32, #tpu.memory_space<vmem>>, vector<8x8x13xf32>
    %1 = vector.shape_cast %0 : vector<8x8x13xf32> to vector<64x13xf32>
    %2 = arith.truncf %1 : vector<64x13xf32> to vector<64x13xbf16>
    %c0_2 = arith.constant 0 : index
    %c0_3 = arith.constant 0 : index
    %3 = vector.load %arg2[%c0_2, %c0_3] : memref<13x256xbf16, #tpu.memory_space<vmem>>, vector<13x256xbf16>
    %cst = arith.constant dense<0.000000e+00> : vector<64x256xf32>
    %4 = tpu.matmul %2, %3, %cst {dimension_numbers = #tpu.dot_dimension_numbers<[1], [0], [0], [1], [0, 0, 1, 1], [], []>} : vector<64x13xbf16>, vector<13x256xbf16>, vector<64x256xf32> -> vector<64x256xf32>
    %c0_4 = arith.constant 0 : index
    %c0_5 = arith.constant 0 : index
    %5 = vector.load %arg4[%c0_4, %c0_5] : memref<1x256xf32, #tpu.memory_space<vmem>>, vector<1x256xf32>
    %6 = vector.broadcast %5 : vector<1x256xf32> to vector<64x256xf32>
    %7 = arith.addf %4, %6 : vector<64x256xf32>
    %8 = vector.shape_cast %7 : vector<64x256xf32> to vector<8x8x256xf32>
    %c0_6 = arith.constant 0 : index
    %c0_7 = arith.constant 0 : index
    %9 = vector.load %arg3[%c0_6, %c0_7] : memref<64x256xbf16, #tpu.memory_space<vmem>>, vector<64x256xbf16>
    %c0_8 = arith.constant 0 : index
    %c0_9 = arith.constant 0 : index
    %10 = vector.load %arg5[%c0_8, %c0_9] : memref<64x256xbf16, #tpu.memory_space<vmem>>, vector<64x256xbf16>
    %c0_10 = arith.constant 0 : index
    %c0_11 = arith.constant 0 : index
    %11 = vector.load %arg6[%c0_10, %c0_11] : memref<64x256xbf16, #tpu.memory_space<vmem>>, vector<64x256xbf16>
    %c0_12 = arith.constant 0 : index
    %c0_13 = arith.constant 0 : index
    %12 = vector.load %arg7[%c0_12, %c0_13] : memref<1x256xf32, #tpu.memory_space<vmem>>, vector<1x256xf32>
    %13 = vector.shape_cast %12 : vector<1x256xf32> to vector<1x256xf32>
    %14 = vector.broadcast %13 : vector<1x256xf32> to vector<8x256xf32>
    %cst_14 = arith.constant 0.000000e+00 : f32
    %15 = vector.broadcast %cst_14 : f32 to vector<8x64xf32>
    %cst_15 = arith.constant 0.000000e+00 : f32
    %16 = vector.broadcast %cst_15 : f32 to vector<8x64xf32>
    %cst_16 = arith.constant 0.000000e+00 : f32
    %17 = vector.broadcast %cst_16 : f32 to vector<8x64xf32>
    %cst_17 = arith.constant 0.000000e+00 : f32
    %18 = vector.broadcast %cst_17 : f32 to vector<8x64xf32>
    %19 = vector.extract_strided_slice %8 {offsets = [0, 0, 0], sizes = [1, 8, 256], strides = [1, 1, 1]} : vector<8x8x256xf32> to vector<1x8x256xf32>
    %20 = vector.shape_cast %19 : vector<1x8x256xf32> to vector<8x256xf32>
    %21 = arith.truncf %15 : vector<8x64xf32> to vector<8x64xbf16>
    %cst_18 = arith.constant dense<0.000000e+00> : vector<8x256xf32>
    %22 = tpu.matmul %21, %9, %cst_18 {dimension_numbers = #tpu.dot_dimension_numbers<[1], [0], [0], [1], [0, 0, 1, 1], [], []>} : vector<8x64xbf16>, vector<64x256xbf16>, vector<8x256xf32> -> vector<8x256xf32>
    %23 = arith.addf %20, %22 : vector<8x256xf32>
    %24 = vector.extract_strided_slice %23 {offsets = [0, 0], sizes = [8, 64], strides = [1, 1]} : vector<8x256xf32> to vector<8x64xf32>
    %25 = arith.negf %24 : vector<8x64xf32>
    %26 = math.exp %25 : vector<8x64xf32>
    %cst_19 = arith.constant 1.000000e+00 : f32
    %27 = vector.broadcast %cst_19 : f32 to vector<8x64xf32>
    %28 = arith.addf %27, %26 : vector<8x64xf32>
    %29 = arith.divf %27, %28 : vector<8x64xf32>
    %30 = vector.extract_strided_slice %23 {offsets = [0, 64], sizes = [8, 64], strides = [1, 1]} : vector<8x256xf32> to vector<8x64xf32>
    %31 = arith.negf %30 : vector<8x64xf32>
    %32 = math.exp %31 : vector<8x64xf32>
    %cst_20 = arith.constant 1.000000e+00 : f32
    %33 = vector.broadcast %cst_20 : f32 to vector<8x64xf32>
    %34 = arith.addf %33, %32 : vector<8x64xf32>
    %35 = arith.divf %33, %34 : vector<8x64xf32>
    %36 = vector.extract_strided_slice %23 {offsets = [0, 128], sizes = [8, 64], strides = [1, 1]} : vector<8x256xf32> to vector<8x64xf32>
    %37 = arith.negf %36 : vector<8x64xf32>
    %38 = math.exp %37 : vector<8x64xf32>
    %cst_21 = arith.constant 1.000000e+00 : f32
    %39 = vector.broadcast %cst_21 : f32 to vector<8x64xf32>
    %40 = arith.addf %39, %38 : vector<8x64xf32>
    %41 = arith.divf %39, %40 : vector<8x64xf32>
    %42 = vector.extract_strided_slice %23 {offsets = [0, 192], sizes = [8, 64], strides = [1, 1]} : vector<8x256xf32> to vector<8x64xf32>
    %43 = math.tanh %42 : vector<8x64xf32>
    %44 = arith.mulf %29, %16 : vector<8x64xf32>
    %45 = arith.mulf %35, %43 : vector<8x64xf32>
    %46 = arith.addf %44, %45 : vector<8x64xf32>
    %47 = math.tanh %46 : vector<8x64xf32>
    %48 = arith.mulf %41, %47 : vector<8x64xf32>
    %49 = arith.truncf %48 : vector<8x64xf32> to vector<8x64xbf16>
    %cst_22 = arith.constant dense<0.000000e+00> : vector<8x256xf32>
    %50 = tpu.matmul %49, %10, %cst_22 {dimension_numbers = #tpu.dot_dimension_numbers<[1], [0], [0], [1], [0, 0, 1, 1], [], []>} : vector<8x64xbf16>, vector<64x256xbf16>, vector<8x256xf32> -> vector<8x256xf32>
    %51 = arith.truncf %17 : vector<8x64xf32> to vector<8x64xbf16>
    %cst_23 = arith.constant dense<0.000000e+00> : vector<8x256xf32>
    %52 = tpu.matmul %51, %11, %cst_23 {dimension_numbers = #tpu.dot_dimension_numbers<[1], [0], [0], [1], [0, 0, 1, 1], [], []>} : vector<8x64xbf16>, vector<64x256xbf16>, vector<8x256xf32> -> vector<8x256xf32>
    %53 = arith.addf %50, %52 : vector<8x256xf32>
    %54 = arith.addf %53, %14 : vector<8x256xf32>
    %55 = vector.extract_strided_slice %54 {offsets = [0, 0], sizes = [8, 64], strides = [1, 1]} : vector<8x256xf32> to vector<8x64xf32>
    %56 = arith.negf %55 : vector<8x64xf32>
    %57 = math.exp %56 : vector<8x64xf32>
    %cst_24 = arith.constant 1.000000e+00 : f32
    %58 = vector.broadcast %cst_24 : f32 to vector<8x64xf32>
    %59 = arith.addf %58, %57 : vector<8x64xf32>
    %60 = arith.divf %58, %59 : vector<8x64xf32>
    %61 = vector.extract_strided_slice %54 {offsets = [0, 64], sizes = [8, 64], strides = [1, 1]} : vector<8x256xf32> to vector<8x64xf32>
    %62 = arith.negf %61 : vector<8x64xf32>
    %63 = math.exp %62 : vector<8x64xf32>
    %cst_25 = arith.constant 1.000000e+00 : f32
    %64 = vector.broadcast %cst_25 : f32 to vector<8x64xf32>
    %65 = arith.addf %64, %63 : vector<8x64xf32>
    %66 = arith.divf %64, %65 : vector<8x64xf32>
    %67 = vector.extract_strided_slice %54 {offsets = [0, 128], sizes = [8, 64], strides = [1, 1]} : vector<8x256xf32> to vector<8x64xf32>
    %68 = arith.negf %67 : vector<8x64xf32>
    %69 = math.exp %68 : vector<8x64xf32>
    %cst_26 = arith.constant 1.000000e+00 : f32
    %70 = vector.broadcast %cst_26 : f32 to vector<8x64xf32>
    %71 = arith.addf %70, %69 : vector<8x64xf32>
    %72 = arith.divf %70, %71 : vector<8x64xf32>
    %73 = vector.extract_strided_slice %54 {offsets = [0, 192], sizes = [8, 64], strides = [1, 1]} : vector<8x256xf32> to vector<8x64xf32>
    %74 = math.tanh %73 : vector<8x64xf32>
    %75 = arith.mulf %60, %18 : vector<8x64xf32>
    %76 = arith.mulf %66, %74 : vector<8x64xf32>
    %77 = arith.addf %75, %76 : vector<8x64xf32>
    %78 = math.tanh %77 : vector<8x64xf32>
    %79 = arith.mulf %72, %78 : vector<8x64xf32>
    %80 = vector.extract_strided_slice %8 {offsets = [1, 0, 0], sizes = [1, 8, 256], strides = [1, 1, 1]} : vector<8x8x256xf32> to vector<1x8x256xf32>
    %81 = vector.shape_cast %80 : vector<1x8x256xf32> to vector<8x256xf32>
    %82 = arith.truncf %48 : vector<8x64xf32> to vector<8x64xbf16>
    %cst_27 = arith.constant dense<0.000000e+00> : vector<8x256xf32>
    %83 = tpu.matmul %82, %9, %cst_27 {dimension_numbers = #tpu.dot_dimension_numbers<[1], [0], [0], [1], [0, 0, 1, 1], [], []>} : vector<8x64xbf16>, vector<64x256xbf16>, vector<8x256xf32> -> vector<8x256xf32>
    %84 = arith.addf %81, %83 : vector<8x256xf32>
    %85 = vector.extract_strided_slice %84 {offsets = [0, 0], sizes = [8, 64], strides = [1, 1]} : vector<8x256xf32> to vector<8x64xf32>
    %86 = arith.negf %85 : vector<8x64xf32>
    %87 = math.exp %86 : vector<8x64xf32>
    %cst_28 = arith.constant 1.000000e+00 : f32
    %88 = vector.broadcast %cst_28 : f32 to vector<8x64xf32>
    %89 = arith.addf %88, %87 : vector<8x64xf32>
    %90 = arith.divf %88, %89 : vector<8x64xf32>
    %91 = vector.extract_strided_slice %84 {offsets = [0, 64], sizes = [8, 64], strides = [1, 1]} : vector<8x256xf32> to vector<8x64xf32>
    %92 = arith.negf %91 : vector<8x64xf32>
    %93 = math.exp %92 : vector<8x64xf32>
    %cst_29 = arith.constant 1.000000e+00 : f32
    %94 = vector.broadcast %cst_29 : f32 to vector<8x64xf32>
    %95 = arith.addf %94, %93 : vector<8x64xf32>
    %96 = arith.divf %94, %95 : vector<8x64xf32>
    %97 = vector.extract_strided_slice %84 {offsets = [0, 128], sizes = [8, 64], strides = [1, 1]} : vector<8x256xf32> to vector<8x64xf32>
    %98 = arith.negf %97 : vector<8x64xf32>
    %99 = math.exp %98 : vector<8x64xf32>
    %cst_30 = arith.constant 1.000000e+00 : f32
    %100 = vector.broadcast %cst_30 : f32 to vector<8x64xf32>
    %101 = arith.addf %100, %99 : vector<8x64xf32>
    %102 = arith.divf %100, %101 : vector<8x64xf32>
    %103 = vector.extract_strided_slice %84 {offsets = [0, 192], sizes = [8, 64], strides = [1, 1]} : vector<8x256xf32> to vector<8x64xf32>
    %104 = math.tanh %103 : vector<8x64xf32>
    %105 = arith.mulf %90, %46 : vector<8x64xf32>
    %106 = arith.mulf %96, %104 : vector<8x64xf32>
    %107 = arith.addf %105, %106 : vector<8x64xf32>
    %108 = math.tanh %107 : vector<8x64xf32>
    %109 = arith.mulf %102, %108 : vector<8x64xf32>
    %110 = arith.truncf %109 : vector<8x64xf32> to vector<8x64xbf16>
    %cst_31 = arith.constant dense<0.000000e+00> : vector<8x256xf32>
    %111 = tpu.matmul %110, %10, %cst_31 {dimension_numbers = #tpu.dot_dimension_numbers<[1], [0], [0], [1], [0, 0, 1, 1], [], []>} : vector<8x64xbf16>, vector<64x256xbf16>, vector<8x256xf32> -> vector<8x256xf32>
    %112 = arith.truncf %79 : vector<8x64xf32> to vector<8x64xbf16>
    %cst_32 = arith.constant dense<0.000000e+00> : vector<8x256xf32>
    %113 = tpu.matmul %112, %11, %cst_32 {dimension_numbers = #tpu.dot_dimension_numbers<[1], [0], [0], [1], [0, 0, 1, 1], [], []>} : vector<8x64xbf16>, vector<64x256xbf16>, vector<8x256xf32> -> vector<8x256xf32>
    %114 = arith.addf %111, %113 : vector<8x256xf32>
    %115 = arith.addf %114, %14 : vector<8x256xf32>
    %116 = vector.extract_strided_slice %115 {offsets = [0, 0], sizes = [8, 64], strides = [1, 1]} : vector<8x256xf32> to vector<8x64xf32>
    %117 = arith.negf %116 : vector<8x64xf32>
    %118 = math.exp %117 : vector<8x64xf32>
    %cst_33 = arith.constant 1.000000e+00 : f32
    %119 = vector.broadcast %cst_33 : f32 to vector<8x64xf32>
    %120 = arith.addf %119, %118 : vector<8x64xf32>
    %121 = arith.divf %119, %120 : vector<8x64xf32>
    %122 = vector.extract_strided_slice %115 {offsets = [0, 64], sizes = [8, 64], strides = [1, 1]} : vector<8x256xf32> to vector<8x64xf32>
    %123 = arith.negf %122 : vector<8x64xf32>
    %124 = math.exp %123 : vector<8x64xf32>
    %cst_34 = arith.constant 1.000000e+00 : f32
    %125 = vector.broadcast %cst_34 : f32 to vector<8x64xf32>
    %126 = arith.addf %125, %124 : vector<8x64xf32>
    %127 = arith.divf %125, %126 : vector<8x64xf32>
    %128 = vector.extract_strided_slice %115 {offsets = [0, 128], sizes = [8, 64], strides = [1, 1]} : vector<8x256xf32> to vector<8x64xf32>
    %129 = arith.negf %128 : vector<8x64xf32>
    %130 = math.exp %129 : vector<8x64xf32>
    %cst_35 = arith.constant 1.000000e+00 : f32
    %131 = vector.broadcast %cst_35 : f32 to vector<8x64xf32>
    %132 = arith.addf %131, %130 : vector<8x64xf32>
    %133 = arith.divf %131, %132 : vector<8x64xf32>
    %134 = vector.extract_strided_slice %115 {offsets = [0, 192], sizes = [8, 64], strides = [1, 1]} : vector<8x256xf32> to vector<8x64xf32>
    %135 = math.tanh %134 : vector<8x64xf32>
    %136 = arith.mulf %121, %77 : vector<8x64xf32>
    %137 = arith.mulf %127, %135 : vector<8x64xf32>
    %138 = arith.addf %136, %137 : vector<8x64xf32>
    %139 = math.tanh %138 : vector<8x64xf32>
    %140 = arith.mulf %133, %139 : vector<8x64xf32>
    %141 = vector.extract_strided_slice %8 {offsets = [2, 0, 0], sizes = [1, 8, 256], strides = [1, 1, 1]} : vector<8x8x256xf32> to vector<1x8x256xf32>
    %142 = vector.shape_cast %141 : vector<1x8x256xf32> to vector<8x256xf32>
    %143 = arith.truncf %109 : vector<8x64xf32> to vector<8x64xbf16>
    %cst_36 = arith.constant dense<0.000000e+00> : vector<8x256xf32>
    %144 = tpu.matmul %143, %9, %cst_36 {dimension_numbers = #tpu.dot_dimension_numbers<[1], [0], [0], [1], [0, 0, 1, 1], [], []>} : vector<8x64xbf16>, vector<64x256xbf16>, vector<8x256xf32> -> vector<8x256xf32>
    %145 = arith.addf %142, %144 : vector<8x256xf32>
    %146 = vector.extract_strided_slice %145 {offsets = [0, 0], sizes = [8, 64], strides = [1, 1]} : vector<8x256xf32> to vector<8x64xf32>
    %147 = arith.negf %146 : vector<8x64xf32>
    %148 = math.exp %147 : vector<8x64xf32>
    %cst_37 = arith.constant 1.000000e+00 : f32
    %149 = vector.broadcast %cst_37 : f32 to vector<8x64xf32>
    %150 = arith.addf %149, %148 : vector<8x64xf32>
    %151 = arith.divf %149, %150 : vector<8x64xf32>
    %152 = vector.extract_strided_slice %145 {offsets = [0, 64], sizes = [8, 64], strides = [1, 1]} : vector<8x256xf32> to vector<8x64xf32>
    %153 = arith.negf %152 : vector<8x64xf32>
    %154 = math.exp %153 : vector<8x64xf32>
    %cst_38 = arith.constant 1.000000e+00 : f32
    %155 = vector.broadcast %cst_38 : f32 to vector<8x64xf32>
    %156 = arith.addf %155, %154 : vector<8x64xf32>
    %157 = arith.divf %155, %156 : vector<8x64xf32>
    %158 = vector.extract_strided_slice %145 {offsets = [0, 128], sizes = [8, 64], strides = [1, 1]} : vector<8x256xf32> to vector<8x64xf32>
    %159 = arith.negf %158 : vector<8x64xf32>
    %160 = math.exp %159 : vector<8x64xf32>
    %cst_39 = arith.constant 1.000000e+00 : f32
    %161 = vector.broadcast %cst_39 : f32 to vector<8x64xf32>
    %162 = arith.addf %161, %160 : vector<8x64xf32>
    %163 = arith.divf %161, %162 : vector<8x64xf32>
    %164 = vector.extract_strided_slice %145 {offsets = [0, 192], sizes = [8, 64], strides = [1, 1]} : vector<8x256xf32> to vector<8x64xf32>
    %165 = math.tanh %164 : vector<8x64xf32>
    %166 = arith.mulf %151, %107 : vector<8x64xf32>
    %167 = arith.mulf %157, %165 : vector<8x64xf32>
    %168 = arith.addf %166, %167 : vector<8x64xf32>
    %169 = math.tanh %168 : vector<8x64xf32>
    %170 = arith.mulf %163, %169 : vector<8x64xf32>
    %171 = arith.truncf %170 : vector<8x64xf32> to vector<8x64xbf16>
    %cst_40 = arith.constant dense<0.000000e+00> : vector<8x256xf32>
    %172 = tpu.matmul %171, %10, %cst_40 {dimension_numbers = #tpu.dot_dimension_numbers<[1], [0], [0], [1], [0, 0, 1, 1], [], []>} : vector<8x64xbf16>, vector<64x256xbf16>, vector<8x256xf32> -> vector<8x256xf32>
    %173 = arith.truncf %140 : vector<8x64xf32> to vector<8x64xbf16>
    %cst_41 = arith.constant dense<0.000000e+00> : vector<8x256xf32>
    %174 = tpu.matmul %173, %11, %cst_41 {dimension_numbers = #tpu.dot_dimension_numbers<[1], [0], [0], [1], [0, 0, 1, 1], [], []>} : vector<8x64xbf16>, vector<64x256xbf16>, vector<8x256xf32> -> vector<8x256xf32>
    %175 = arith.addf %172, %174 : vector<8x256xf32>
    %176 = arith.addf %175, %14 : vector<8x256xf32>
    %177 = vector.extract_strided_slice %176 {offsets = [0, 0], sizes = [8, 64], strides = [1, 1]} : vector<8x256xf32> to vector<8x64xf32>
    %178 = arith.negf %177 : vector<8x64xf32>
    %179 = math.exp %178 : vector<8x64xf32>
    %cst_42 = arith.constant 1.000000e+00 : f32
    %180 = vector.broadcast %cst_42 : f32 to vector<8x64xf32>
    %181 = arith.addf %180, %179 : vector<8x64xf32>
    %182 = arith.divf %180, %181 : vector<8x64xf32>
    %183 = vector.extract_strided_slice %176 {offsets = [0, 64], sizes = [8, 64], strides = [1, 1]} : vector<8x256xf32> to vector<8x64xf32>
    %184 = arith.negf %183 : vector<8x64xf32>
    %185 = math.exp %184 : vector<8x64xf32>
    %cst_43 = arith.constant 1.000000e+00 : f32
    %186 = vector.broadcast %cst_43 : f32 to vector<8x64xf32>
    %187 = arith.addf %186, %185 : vector<8x64xf32>
    %188 = arith.divf %186, %187 : vector<8x64xf32>
    %189 = vector.extract_strided_slice %176 {offsets = [0, 128], sizes = [8, 64], strides = [1, 1]} : vector<8x256xf32> to vector<8x64xf32>
    %190 = arith.negf %189 : vector<8x64xf32>
    %191 = math.exp %190 : vector<8x64xf32>
    %cst_44 = arith.constant 1.000000e+00 : f32
    %192 = vector.broadcast %cst_44 : f32 to vector<8x64xf32>
    %193 = arith.addf %192, %191 : vector<8x64xf32>
    %194 = arith.divf %192, %193 : vector<8x64xf32>
    %195 = vector.extract_strided_slice %176 {offsets = [0, 192], sizes = [8, 64], strides = [1, 1]} : vector<8x256xf32> to vector<8x64xf32>
    %196 = math.tanh %195 : vector<8x64xf32>
    %197 = arith.mulf %182, %138 : vector<8x64xf32>
    %198 = arith.mulf %188, %196 : vector<8x64xf32>
    %199 = arith.addf %197, %198 : vector<8x64xf32>
    %200 = math.tanh %199 : vector<8x64xf32>
    %201 = arith.mulf %194, %200 : vector<8x64xf32>
    %202 = vector.extract_strided_slice %8 {offsets = [3, 0, 0], sizes = [1, 8, 256], strides = [1, 1, 1]} : vector<8x8x256xf32> to vector<1x8x256xf32>
    %203 = vector.shape_cast %202 : vector<1x8x256xf32> to vector<8x256xf32>
    %204 = arith.truncf %170 : vector<8x64xf32> to vector<8x64xbf16>
    %cst_45 = arith.constant dense<0.000000e+00> : vector<8x256xf32>
    %205 = tpu.matmul %204, %9, %cst_45 {dimension_numbers = #tpu.dot_dimension_numbers<[1], [0], [0], [1], [0, 0, 1, 1], [], []>} : vector<8x64xbf16>, vector<64x256xbf16>, vector<8x256xf32> -> vector<8x256xf32>
    %206 = arith.addf %203, %205 : vector<8x256xf32>
    %207 = vector.extract_strided_slice %206 {offsets = [0, 0], sizes = [8, 64], strides = [1, 1]} : vector<8x256xf32> to vector<8x64xf32>
    %208 = arith.negf %207 : vector<8x64xf32>
    %209 = math.exp %208 : vector<8x64xf32>
    %cst_46 = arith.constant 1.000000e+00 : f32
    %210 = vector.broadcast %cst_46 : f32 to vector<8x64xf32>
    %211 = arith.addf %210, %209 : vector<8x64xf32>
    %212 = arith.divf %210, %211 : vector<8x64xf32>
    %213 = vector.extract_strided_slice %206 {offsets = [0, 64], sizes = [8, 64], strides = [1, 1]} : vector<8x256xf32> to vector<8x64xf32>
    %214 = arith.negf %213 : vector<8x64xf32>
    %215 = math.exp %214 : vector<8x64xf32>
    %cst_47 = arith.constant 1.000000e+00 : f32
    %216 = vector.broadcast %cst_47 : f32 to vector<8x64xf32>
    %217 = arith.addf %216, %215 : vector<8x64xf32>
    %218 = arith.divf %216, %217 : vector<8x64xf32>
    %219 = vector.extract_strided_slice %206 {offsets = [0, 128], sizes = [8, 64], strides = [1, 1]} : vector<8x256xf32> to vector<8x64xf32>
    %220 = arith.negf %219 : vector<8x64xf32>
    %221 = math.exp %220 : vector<8x64xf32>
    %cst_48 = arith.constant 1.000000e+00 : f32
    %222 = vector.broadcast %cst_48 : f32 to vector<8x64xf32>
    %223 = arith.addf %222, %221 : vector<8x64xf32>
    %224 = arith.divf %222, %223 : vector<8x64xf32>
    %225 = vector.extract_strided_slice %206 {offsets = [0, 192], sizes = [8, 64], strides = [1, 1]} : vector<8x256xf32> to vector<8x64xf32>
    %226 = math.tanh %225 : vector<8x64xf32>
    %227 = arith.mulf %212, %168 : vector<8x64xf32>
    %228 = arith.mulf %218, %226 : vector<8x64xf32>
    %229 = arith.addf %227, %228 : vector<8x64xf32>
    %230 = math.tanh %229 : vector<8x64xf32>
    %231 = arith.mulf %224, %230 : vector<8x64xf32>
    %232 = arith.truncf %231 : vector<8x64xf32> to vector<8x64xbf16>
    %cst_49 = arith.constant dense<0.000000e+00> : vector<8x256xf32>
    %233 = tpu.matmul %232, %10, %cst_49 {dimension_numbers = #tpu.dot_dimension_numbers<[1], [0], [0], [1], [0, 0, 1, 1], [], []>} : vector<8x64xbf16>, vector<64x256xbf16>, vector<8x256xf32> -> vector<8x256xf32>
    %234 = arith.truncf %201 : vector<8x64xf32> to vector<8x64xbf16>
    %cst_50 = arith.constant dense<0.000000e+00> : vector<8x256xf32>
    %235 = tpu.matmul %234, %11, %cst_50 {dimension_numbers = #tpu.dot_dimension_numbers<[1], [0], [0], [1], [0, 0, 1, 1], [], []>} : vector<8x64xbf16>, vector<64x256xbf16>, vector<8x256xf32> -> vector<8x256xf32>
    %236 = arith.addf %233, %235 : vector<8x256xf32>
    %237 = arith.addf %236, %14 : vector<8x256xf32>
    %238 = vector.extract_strided_slice %237 {offsets = [0, 0], sizes = [8, 64], strides = [1, 1]} : vector<8x256xf32> to vector<8x64xf32>
    %239 = arith.negf %238 : vector<8x64xf32>
    %240 = math.exp %239 : vector<8x64xf32>
    %cst_51 = arith.constant 1.000000e+00 : f32
    %241 = vector.broadcast %cst_51 : f32 to vector<8x64xf32>
    %242 = arith.addf %241, %240 : vector<8x64xf32>
    %243 = arith.divf %241, %242 : vector<8x64xf32>
    %244 = vector.extract_strided_slice %237 {offsets = [0, 64], sizes = [8, 64], strides = [1, 1]} : vector<8x256xf32> to vector<8x64xf32>
    %245 = arith.negf %244 : vector<8x64xf32>
    %246 = math.exp %245 : vector<8x64xf32>
    %cst_52 = arith.constant 1.000000e+00 : f32
    %247 = vector.broadcast %cst_52 : f32 to vector<8x64xf32>
    %248 = arith.addf %247, %246 : vector<8x64xf32>
    %249 = arith.divf %247, %248 : vector<8x64xf32>
    %250 = vector.extract_strided_slice %237 {offsets = [0, 128], sizes = [8, 64], strides = [1, 1]} : vector<8x256xf32> to vector<8x64xf32>
    %251 = arith.negf %250 : vector<8x64xf32>
    %252 = math.exp %251 : vector<8x64xf32>
    %cst_53 = arith.constant 1.000000e+00 : f32
    %253 = vector.broadcast %cst_53 : f32 to vector<8x64xf32>
    %254 = arith.addf %253, %252 : vector<8x64xf32>
    %255 = arith.divf %253, %254 : vector<8x64xf32>
    %256 = vector.extract_strided_slice %237 {offsets = [0, 192], sizes = [8, 64], strides = [1, 1]} : vector<8x256xf32> to vector<8x64xf32>
    %257 = math.tanh %256 : vector<8x64xf32>
    %258 = arith.mulf %243, %199 : vector<8x64xf32>
    %259 = arith.mulf %249, %257 : vector<8x64xf32>
    %260 = arith.addf %258, %259 : vector<8x64xf32>
    %261 = math.tanh %260 : vector<8x64xf32>
    %262 = arith.mulf %255, %261 : vector<8x64xf32>
    %263 = vector.extract_strided_slice %8 {offsets = [4, 0, 0], sizes = [1, 8, 256], strides = [1, 1, 1]} : vector<8x8x256xf32> to vector<1x8x256xf32>
    %264 = vector.shape_cast %263 : vector<1x8x256xf32> to vector<8x256xf32>
    %265 = arith.truncf %231 : vector<8x64xf32> to vector<8x64xbf16>
    %cst_54 = arith.constant dense<0.000000e+00> : vector<8x256xf32>
    %266 = tpu.matmul %265, %9, %cst_54 {dimension_numbers = #tpu.dot_dimension_numbers<[1], [0], [0], [1], [0, 0, 1, 1], [], []>} : vector<8x64xbf16>, vector<64x256xbf16>, vector<8x256xf32> -> vector<8x256xf32>
    %267 = arith.addf %264, %266 : vector<8x256xf32>
    %268 = vector.extract_strided_slice %267 {offsets = [0, 0], sizes = [8, 64], strides = [1, 1]} : vector<8x256xf32> to vector<8x64xf32>
    %269 = arith.negf %268 : vector<8x64xf32>
    %270 = math.exp %269 : vector<8x64xf32>
    %cst_55 = arith.constant 1.000000e+00 : f32
    %271 = vector.broadcast %cst_55 : f32 to vector<8x64xf32>
    %272 = arith.addf %271, %270 : vector<8x64xf32>
    %273 = arith.divf %271, %272 : vector<8x64xf32>
    %274 = vector.extract_strided_slice %267 {offsets = [0, 64], sizes = [8, 64], strides = [1, 1]} : vector<8x256xf32> to vector<8x64xf32>
    %275 = arith.negf %274 : vector<8x64xf32>
    %276 = math.exp %275 : vector<8x64xf32>
    %cst_56 = arith.constant 1.000000e+00 : f32
    %277 = vector.broadcast %cst_56 : f32 to vector<8x64xf32>
    %278 = arith.addf %277, %276 : vector<8x64xf32>
    %279 = arith.divf %277, %278 : vector<8x64xf32>
    %280 = vector.extract_strided_slice %267 {offsets = [0, 128], sizes = [8, 64], strides = [1, 1]} : vector<8x256xf32> to vector<8x64xf32>
    %281 = arith.negf %280 : vector<8x64xf32>
    %282 = math.exp %281 : vector<8x64xf32>
    %cst_57 = arith.constant 1.000000e+00 : f32
    %283 = vector.broadcast %cst_57 : f32 to vector<8x64xf32>
    %284 = arith.addf %283, %282 : vector<8x64xf32>
    %285 = arith.divf %283, %284 : vector<8x64xf32>
    %286 = vector.extract_strided_slice %267 {offsets = [0, 192], sizes = [8, 64], strides = [1, 1]} : vector<8x256xf32> to vector<8x64xf32>
    %287 = math.tanh %286 : vector<8x64xf32>
    %288 = arith.mulf %273, %229 : vector<8x64xf32>
    %289 = arith.mulf %279, %287 : vector<8x64xf32>
    %290 = arith.addf %288, %289 : vector<8x64xf32>
    %291 = math.tanh %290 : vector<8x64xf32>
    %292 = arith.mulf %285, %291 : vector<8x64xf32>
    %293 = arith.truncf %292 : vector<8x64xf32> to vector<8x64xbf16>
    %cst_58 = arith.constant dense<0.000000e+00> : vector<8x256xf32>
    %294 = tpu.matmul %293, %10, %cst_58 {dimension_numbers = #tpu.dot_dimension_numbers<[1], [0], [0], [1], [0, 0, 1, 1], [], []>} : vector<8x64xbf16>, vector<64x256xbf16>, vector<8x256xf32> -> vector<8x256xf32>
    %295 = arith.truncf %262 : vector<8x64xf32> to vector<8x64xbf16>
    %cst_59 = arith.constant dense<0.000000e+00> : vector<8x256xf32>
    %296 = tpu.matmul %295, %11, %cst_59 {dimension_numbers = #tpu.dot_dimension_numbers<[1], [0], [0], [1], [0, 0, 1, 1], [], []>} : vector<8x64xbf16>, vector<64x256xbf16>, vector<8x256xf32> -> vector<8x256xf32>
    %297 = arith.addf %294, %296 : vector<8x256xf32>
    %298 = arith.addf %297, %14 : vector<8x256xf32>
    %299 = vector.extract_strided_slice %298 {offsets = [0, 0], sizes = [8, 64], strides = [1, 1]} : vector<8x256xf32> to vector<8x64xf32>
    %300 = arith.negf %299 : vector<8x64xf32>
    %301 = math.exp %300 : vector<8x64xf32>
    %cst_60 = arith.constant 1.000000e+00 : f32
    %302 = vector.broadcast %cst_60 : f32 to vector<8x64xf32>
    %303 = arith.addf %302, %301 : vector<8x64xf32>
    %304 = arith.divf %302, %303 : vector<8x64xf32>
    %305 = vector.extract_strided_slice %298 {offsets = [0, 64], sizes = [8, 64], strides = [1, 1]} : vector<8x256xf32> to vector<8x64xf32>
    %306 = arith.negf %305 : vector<8x64xf32>
    %307 = math.exp %306 : vector<8x64xf32>
    %cst_61 = arith.constant 1.000000e+00 : f32
    %308 = vector.broadcast %cst_61 : f32 to vector<8x64xf32>
    %309 = arith.addf %308, %307 : vector<8x64xf32>
    %310 = arith.divf %308, %309 : vector<8x64xf32>
    %311 = vector.extract_strided_slice %298 {offsets = [0, 128], sizes = [8, 64], strides = [1, 1]} : vector<8x256xf32> to vector<8x64xf32>
    %312 = arith.negf %311 : vector<8x64xf32>
    %313 = math.exp %312 : vector<8x64xf32>
    %cst_62 = arith.constant 1.000000e+00 : f32
    %314 = vector.broadcast %cst_62 : f32 to vector<8x64xf32>
    %315 = arith.addf %314, %313 : vector<8x64xf32>
    %316 = arith.divf %314, %315 : vector<8x64xf32>
    %317 = vector.extract_strided_slice %298 {offsets = [0, 192], sizes = [8, 64], strides = [1, 1]} : vector<8x256xf32> to vector<8x64xf32>
    %318 = math.tanh %317 : vector<8x64xf32>
    %319 = arith.mulf %304, %260 : vector<8x64xf32>
    %320 = arith.mulf %310, %318 : vector<8x64xf32>
    %321 = arith.addf %319, %320 : vector<8x64xf32>
    %322 = math.tanh %321 : vector<8x64xf32>
    %323 = arith.mulf %316, %322 : vector<8x64xf32>
    %324 = vector.extract_strided_slice %8 {offsets = [5, 0, 0], sizes = [1, 8, 256], strides = [1, 1, 1]} : vector<8x8x256xf32> to vector<1x8x256xf32>
    %325 = vector.shape_cast %324 : vector<1x8x256xf32> to vector<8x256xf32>
    %326 = arith.truncf %292 : vector<8x64xf32> to vector<8x64xbf16>
    %cst_63 = arith.constant dense<0.000000e+00> : vector<8x256xf32>
    %327 = tpu.matmul %326, %9, %cst_63 {dimension_numbers = #tpu.dot_dimension_numbers<[1], [0], [0], [1], [0, 0, 1, 1], [], []>} : vector<8x64xbf16>, vector<64x256xbf16>, vector<8x256xf32> -> vector<8x256xf32>
    %328 = arith.addf %325, %327 : vector<8x256xf32>
    %329 = vector.extract_strided_slice %328 {offsets = [0, 0], sizes = [8, 64], strides = [1, 1]} : vector<8x256xf32> to vector<8x64xf32>
    %330 = arith.negf %329 : vector<8x64xf32>
    %331 = math.exp %330 : vector<8x64xf32>
    %cst_64 = arith.constant 1.000000e+00 : f32
    %332 = vector.broadcast %cst_64 : f32 to vector<8x64xf32>
    %333 = arith.addf %332, %331 : vector<8x64xf32>
    %334 = arith.divf %332, %333 : vector<8x64xf32>
    %335 = vector.extract_strided_slice %328 {offsets = [0, 64], sizes = [8, 64], strides = [1, 1]} : vector<8x256xf32> to vector<8x64xf32>
    %336 = arith.negf %335 : vector<8x64xf32>
    %337 = math.exp %336 : vector<8x64xf32>
    %cst_65 = arith.constant 1.000000e+00 : f32
    %338 = vector.broadcast %cst_65 : f32 to vector<8x64xf32>
    %339 = arith.addf %338, %337 : vector<8x64xf32>
    %340 = arith.divf %338, %339 : vector<8x64xf32>
    %341 = vector.extract_strided_slice %328 {offsets = [0, 128], sizes = [8, 64], strides = [1, 1]} : vector<8x256xf32> to vector<8x64xf32>
    %342 = arith.negf %341 : vector<8x64xf32>
    %343 = math.exp %342 : vector<8x64xf32>
    %cst_66 = arith.constant 1.000000e+00 : f32
    %344 = vector.broadcast %cst_66 : f32 to vector<8x64xf32>
    %345 = arith.addf %344, %343 : vector<8x64xf32>
    %346 = arith.divf %344, %345 : vector<8x64xf32>
    %347 = vector.extract_strided_slice %328 {offsets = [0, 192], sizes = [8, 64], strides = [1, 1]} : vector<8x256xf32> to vector<8x64xf32>
    %348 = math.tanh %347 : vector<8x64xf32>
    %349 = arith.mulf %334, %290 : vector<8x64xf32>
    %350 = arith.mulf %340, %348 : vector<8x64xf32>
    %351 = arith.addf %349, %350 : vector<8x64xf32>
    %352 = math.tanh %351 : vector<8x64xf32>
    %353 = arith.mulf %346, %352 : vector<8x64xf32>
    %354 = arith.truncf %353 : vector<8x64xf32> to vector<8x64xbf16>
    %cst_67 = arith.constant dense<0.000000e+00> : vector<8x256xf32>
    %355 = tpu.matmul %354, %10, %cst_67 {dimension_numbers = #tpu.dot_dimension_numbers<[1], [0], [0], [1], [0, 0, 1, 1], [], []>} : vector<8x64xbf16>, vector<64x256xbf16>, vector<8x256xf32> -> vector<8x256xf32>
    %356 = arith.truncf %323 : vector<8x64xf32> to vector<8x64xbf16>
    %cst_68 = arith.constant dense<0.000000e+00> : vector<8x256xf32>
    %357 = tpu.matmul %356, %11, %cst_68 {dimension_numbers = #tpu.dot_dimension_numbers<[1], [0], [0], [1], [0, 0, 1, 1], [], []>} : vector<8x64xbf16>, vector<64x256xbf16>, vector<8x256xf32> -> vector<8x256xf32>
    %358 = arith.addf %355, %357 : vector<8x256xf32>
    %359 = arith.addf %358, %14 : vector<8x256xf32>
    %360 = vector.extract_strided_slice %359 {offsets = [0, 0], sizes = [8, 64], strides = [1, 1]} : vector<8x256xf32> to vector<8x64xf32>
    %361 = arith.negf %360 : vector<8x64xf32>
    %362 = math.exp %361 : vector<8x64xf32>
    %cst_69 = arith.constant 1.000000e+00 : f32
    %363 = vector.broadcast %cst_69 : f32 to vector<8x64xf32>
    %364 = arith.addf %363, %362 : vector<8x64xf32>
    %365 = arith.divf %363, %364 : vector<8x64xf32>
    %366 = vector.extract_strided_slice %359 {offsets = [0, 64], sizes = [8, 64], strides = [1, 1]} : vector<8x256xf32> to vector<8x64xf32>
    %367 = arith.negf %366 : vector<8x64xf32>
    %368 = math.exp %367 : vector<8x64xf32>
    %cst_70 = arith.constant 1.000000e+00 : f32
    %369 = vector.broadcast %cst_70 : f32 to vector<8x64xf32>
    %370 = arith.addf %369, %368 : vector<8x64xf32>
    %371 = arith.divf %369, %370 : vector<8x64xf32>
    %372 = vector.extract_strided_slice %359 {offsets = [0, 128], sizes = [8, 64], strides = [1, 1]} : vector<8x256xf32> to vector<8x64xf32>
    %373 = arith.negf %372 : vector<8x64xf32>
    %374 = math.exp %373 : vector<8x64xf32>
    %cst_71 = arith.constant 1.000000e+00 : f32
    %375 = vector.broadcast %cst_71 : f32 to vector<8x64xf32>
    %376 = arith.addf %375, %374 : vector<8x64xf32>
    %377 = arith.divf %375, %376 : vector<8x64xf32>
    %378 = vector.extract_strided_slice %359 {offsets = [0, 192], sizes = [8, 64], strides = [1, 1]} : vector<8x256xf32> to vector<8x64xf32>
    %379 = math.tanh %378 : vector<8x64xf32>
    %380 = arith.mulf %365, %321 : vector<8x64xf32>
    %381 = arith.mulf %371, %379 : vector<8x64xf32>
    %382 = arith.addf %380, %381 : vector<8x64xf32>
    %383 = math.tanh %382 : vector<8x64xf32>
    %384 = arith.mulf %377, %383 : vector<8x64xf32>
    %385 = vector.extract_strided_slice %8 {offsets = [6, 0, 0], sizes = [1, 8, 256], strides = [1, 1, 1]} : vector<8x8x256xf32> to vector<1x8x256xf32>
    %386 = vector.shape_cast %385 : vector<1x8x256xf32> to vector<8x256xf32>
    %387 = arith.truncf %353 : vector<8x64xf32> to vector<8x64xbf16>
    %cst_72 = arith.constant dense<0.000000e+00> : vector<8x256xf32>
    %388 = tpu.matmul %387, %9, %cst_72 {dimension_numbers = #tpu.dot_dimension_numbers<[1], [0], [0], [1], [0, 0, 1, 1], [], []>} : vector<8x64xbf16>, vector<64x256xbf16>, vector<8x256xf32> -> vector<8x256xf32>
    %389 = arith.addf %386, %388 : vector<8x256xf32>
    %390 = vector.extract_strided_slice %389 {offsets = [0, 0], sizes = [8, 64], strides = [1, 1]} : vector<8x256xf32> to vector<8x64xf32>
    %391 = arith.negf %390 : vector<8x64xf32>
    %392 = math.exp %391 : vector<8x64xf32>
    %cst_73 = arith.constant 1.000000e+00 : f32
    %393 = vector.broadcast %cst_73 : f32 to vector<8x64xf32>
    %394 = arith.addf %393, %392 : vector<8x64xf32>
    %395 = arith.divf %393, %394 : vector<8x64xf32>
    %396 = vector.extract_strided_slice %389 {offsets = [0, 64], sizes = [8, 64], strides = [1, 1]} : vector<8x256xf32> to vector<8x64xf32>
    %397 = arith.negf %396 : vector<8x64xf32>
    %398 = math.exp %397 : vector<8x64xf32>
    %cst_74 = arith.constant 1.000000e+00 : f32
    %399 = vector.broadcast %cst_74 : f32 to vector<8x64xf32>
    %400 = arith.addf %399, %398 : vector<8x64xf32>
    %401 = arith.divf %399, %400 : vector<8x64xf32>
    %402 = vector.extract_strided_slice %389 {offsets = [0, 128], sizes = [8, 64], strides = [1, 1]} : vector<8x256xf32> to vector<8x64xf32>
    %403 = arith.negf %402 : vector<8x64xf32>
    %404 = math.exp %403 : vector<8x64xf32>
    %cst_75 = arith.constant 1.000000e+00 : f32
    %405 = vector.broadcast %cst_75 : f32 to vector<8x64xf32>
    %406 = arith.addf %405, %404 : vector<8x64xf32>
    %407 = arith.divf %405, %406 : vector<8x64xf32>
    %408 = vector.extract_strided_slice %389 {offsets = [0, 192], sizes = [8, 64], strides = [1, 1]} : vector<8x256xf32> to vector<8x64xf32>
    %409 = math.tanh %408 : vector<8x64xf32>
    %410 = arith.mulf %395, %351 : vector<8x64xf32>
    %411 = arith.mulf %401, %409 : vector<8x64xf32>
    %412 = arith.addf %410, %411 : vector<8x64xf32>
    %413 = math.tanh %412 : vector<8x64xf32>
    %414 = arith.mulf %407, %413 : vector<8x64xf32>
    %415 = arith.truncf %414 : vector<8x64xf32> to vector<8x64xbf16>
    %cst_76 = arith.constant dense<0.000000e+00> : vector<8x256xf32>
    %416 = tpu.matmul %415, %10, %cst_76 {dimension_numbers = #tpu.dot_dimension_numbers<[1], [0], [0], [1], [0, 0, 1, 1], [], []>} : vector<8x64xbf16>, vector<64x256xbf16>, vector<8x256xf32> -> vector<8x256xf32>
    %417 = arith.truncf %384 : vector<8x64xf32> to vector<8x64xbf16>
    %cst_77 = arith.constant dense<0.000000e+00> : vector<8x256xf32>
    %418 = tpu.matmul %417, %11, %cst_77 {dimension_numbers = #tpu.dot_dimension_numbers<[1], [0], [0], [1], [0, 0, 1, 1], [], []>} : vector<8x64xbf16>, vector<64x256xbf16>, vector<8x256xf32> -> vector<8x256xf32>
    %419 = arith.addf %416, %418 : vector<8x256xf32>
    %420 = arith.addf %419, %14 : vector<8x256xf32>
    %421 = vector.extract_strided_slice %420 {offsets = [0, 0], sizes = [8, 64], strides = [1, 1]} : vector<8x256xf32> to vector<8x64xf32>
    %422 = arith.negf %421 : vector<8x64xf32>
    %423 = math.exp %422 : vector<8x64xf32>
    %cst_78 = arith.constant 1.000000e+00 : f32
    %424 = vector.broadcast %cst_78 : f32 to vector<8x64xf32>
    %425 = arith.addf %424, %423 : vector<8x64xf32>
    %426 = arith.divf %424, %425 : vector<8x64xf32>
    %427 = vector.extract_strided_slice %420 {offsets = [0, 64], sizes = [8, 64], strides = [1, 1]} : vector<8x256xf32> to vector<8x64xf32>
    %428 = arith.negf %427 : vector<8x64xf32>
    %429 = math.exp %428 : vector<8x64xf32>
    %cst_79 = arith.constant 1.000000e+00 : f32
    %430 = vector.broadcast %cst_79 : f32 to vector<8x64xf32>
    %431 = arith.addf %430, %429 : vector<8x64xf32>
    %432 = arith.divf %430, %431 : vector<8x64xf32>
    %433 = vector.extract_strided_slice %420 {offsets = [0, 128], sizes = [8, 64], strides = [1, 1]} : vector<8x256xf32> to vector<8x64xf32>
    %434 = arith.negf %433 : vector<8x64xf32>
    %435 = math.exp %434 : vector<8x64xf32>
    %cst_80 = arith.constant 1.000000e+00 : f32
    %436 = vector.broadcast %cst_80 : f32 to vector<8x64xf32>
    %437 = arith.addf %436, %435 : vector<8x64xf32>
    %438 = arith.divf %436, %437 : vector<8x64xf32>
    %439 = vector.extract_strided_slice %420 {offsets = [0, 192], sizes = [8, 64], strides = [1, 1]} : vector<8x256xf32> to vector<8x64xf32>
    %440 = math.tanh %439 : vector<8x64xf32>
    %441 = arith.mulf %426, %382 : vector<8x64xf32>
    %442 = arith.mulf %432, %440 : vector<8x64xf32>
    %443 = arith.addf %441, %442 : vector<8x64xf32>
    %444 = math.tanh %443 : vector<8x64xf32>
    %445 = arith.mulf %438, %444 : vector<8x64xf32>
    %446 = vector.extract_strided_slice %8 {offsets = [7, 0, 0], sizes = [1, 8, 256], strides = [1, 1, 1]} : vector<8x8x256xf32> to vector<1x8x256xf32>
    %447 = vector.shape_cast %446 : vector<1x8x256xf32> to vector<8x256xf32>
    %448 = arith.truncf %414 : vector<8x64xf32> to vector<8x64xbf16>
    %cst_81 = arith.constant dense<0.000000e+00> : vector<8x256xf32>
    %449 = tpu.matmul %448, %9, %cst_81 {dimension_numbers = #tpu.dot_dimension_numbers<[1], [0], [0], [1], [0, 0, 1, 1], [], []>} : vector<8x64xbf16>, vector<64x256xbf16>, vector<8x256xf32> -> vector<8x256xf32>
    %450 = arith.addf %447, %449 : vector<8x256xf32>
    %451 = vector.extract_strided_slice %450 {offsets = [0, 0], sizes = [8, 64], strides = [1, 1]} : vector<8x256xf32> to vector<8x64xf32>
    %452 = arith.negf %451 : vector<8x64xf32>
    %453 = math.exp %452 : vector<8x64xf32>
    %cst_82 = arith.constant 1.000000e+00 : f32
    %454 = vector.broadcast %cst_82 : f32 to vector<8x64xf32>
    %455 = arith.addf %454, %453 : vector<8x64xf32>
    %456 = arith.divf %454, %455 : vector<8x64xf32>
    %457 = vector.extract_strided_slice %450 {offsets = [0, 64], sizes = [8, 64], strides = [1, 1]} : vector<8x256xf32> to vector<8x64xf32>
    %458 = arith.negf %457 : vector<8x64xf32>
    %459 = math.exp %458 : vector<8x64xf32>
    %cst_83 = arith.constant 1.000000e+00 : f32
    %460 = vector.broadcast %cst_83 : f32 to vector<8x64xf32>
    %461 = arith.addf %460, %459 : vector<8x64xf32>
    %462 = arith.divf %460, %461 : vector<8x64xf32>
    %463 = vector.extract_strided_slice %450 {offsets = [0, 128], sizes = [8, 64], strides = [1, 1]} : vector<8x256xf32> to vector<8x64xf32>
    %464 = arith.negf %463 : vector<8x64xf32>
    %465 = math.exp %464 : vector<8x64xf32>
    %cst_84 = arith.constant 1.000000e+00 : f32
    %466 = vector.broadcast %cst_84 : f32 to vector<8x64xf32>
    %467 = arith.addf %466, %465 : vector<8x64xf32>
    %468 = arith.divf %466, %467 : vector<8x64xf32>
    %469 = vector.extract_strided_slice %450 {offsets = [0, 192], sizes = [8, 64], strides = [1, 1]} : vector<8x256xf32> to vector<8x64xf32>
    %470 = math.tanh %469 : vector<8x64xf32>
    %471 = arith.mulf %456, %412 : vector<8x64xf32>
    %472 = arith.mulf %462, %470 : vector<8x64xf32>
    %473 = arith.addf %471, %472 : vector<8x64xf32>
    %474 = math.tanh %473 : vector<8x64xf32>
    %475 = arith.mulf %468, %474 : vector<8x64xf32>
    %476 = arith.truncf %475 : vector<8x64xf32> to vector<8x64xbf16>
    %cst_85 = arith.constant dense<0.000000e+00> : vector<8x256xf32>
    %477 = tpu.matmul %476, %10, %cst_85 {dimension_numbers = #tpu.dot_dimension_numbers<[1], [0], [0], [1], [0, 0, 1, 1], [], []>} : vector<8x64xbf16>, vector<64x256xbf16>, vector<8x256xf32> -> vector<8x256xf32>
    %478 = arith.truncf %445 : vector<8x64xf32> to vector<8x64xbf16>
    %cst_86 = arith.constant dense<0.000000e+00> : vector<8x256xf32>
    %479 = tpu.matmul %478, %11, %cst_86 {dimension_numbers = #tpu.dot_dimension_numbers<[1], [0], [0], [1], [0, 0, 1, 1], [], []>} : vector<8x64xbf16>, vector<64x256xbf16>, vector<8x256xf32> -> vector<8x256xf32>
    %480 = arith.addf %477, %479 : vector<8x256xf32>
    %481 = arith.addf %480, %14 : vector<8x256xf32>
    %482 = vector.extract_strided_slice %481 {offsets = [0, 0], sizes = [8, 64], strides = [1, 1]} : vector<8x256xf32> to vector<8x64xf32>
    %483 = arith.negf %482 : vector<8x64xf32>
    %484 = math.exp %483 : vector<8x64xf32>
    %cst_87 = arith.constant 1.000000e+00 : f32
    %485 = vector.broadcast %cst_87 : f32 to vector<8x64xf32>
    %486 = arith.addf %485, %484 : vector<8x64xf32>
    %487 = arith.divf %485, %486 : vector<8x64xf32>
    %488 = vector.extract_strided_slice %481 {offsets = [0, 64], sizes = [8, 64], strides = [1, 1]} : vector<8x256xf32> to vector<8x64xf32>
    %489 = arith.negf %488 : vector<8x64xf32>
    %490 = math.exp %489 : vector<8x64xf32>
    %cst_88 = arith.constant 1.000000e+00 : f32
    %491 = vector.broadcast %cst_88 : f32 to vector<8x64xf32>
    %492 = arith.addf %491, %490 : vector<8x64xf32>
    %493 = arith.divf %491, %492 : vector<8x64xf32>
    %494 = vector.extract_strided_slice %481 {offsets = [0, 128], sizes = [8, 64], strides = [1, 1]} : vector<8x256xf32> to vector<8x64xf32>
    %495 = arith.negf %494 : vector<8x64xf32>
    %496 = math.exp %495 : vector<8x64xf32>
    %cst_89 = arith.constant 1.000000e+00 : f32
    %497 = vector.broadcast %cst_89 : f32 to vector<8x64xf32>
    %498 = arith.addf %497, %496 : vector<8x64xf32>
    %499 = arith.divf %497, %498 : vector<8x64xf32>
    %500 = vector.extract_strided_slice %481 {offsets = [0, 192], sizes = [8, 64], strides = [1, 1]} : vector<8x256xf32> to vector<8x64xf32>
    %501 = math.tanh %500 : vector<8x64xf32>
    %502 = arith.mulf %487, %443 : vector<8x64xf32>
    %503 = arith.mulf %493, %501 : vector<8x64xf32>
    %504 = arith.addf %502, %503 : vector<8x64xf32>
    %505 = math.tanh %504 : vector<8x64xf32>
    %506 = arith.mulf %499, %505 : vector<8x64xf32>
    %c0_90 = arith.constant 0 : index
    %c0_91 = arith.constant 0 : index
    %507 = vector.load %arg8[%c0_90, %c0_91] : memref<64x16xf32, #tpu.memory_space<vmem>>, vector<64x16xf32>
    %cst_92 = arith.constant dense<0.000000e+00> : vector<8x16xf32>
    %508 = tpu.matmul %506, %507, %cst_92 {dimension_numbers = #tpu.dot_dimension_numbers<[1], [0], [0], [1], [0, 0, 1, 1], [], []>} : vector<8x64xf32>, vector<64x16xf32>, vector<8x16xf32> -> vector<8x16xf32>
    %c0_93 = arith.constant 0 : index
    %c0_94 = arith.constant 0 : index
    %509 = vector.load %arg9[%c0_93, %c0_94] : memref<1x16xf32, #tpu.memory_space<vmem>>, vector<1x16xf32>
    %510 = vector.broadcast %509 : vector<1x16xf32> to vector<8x16xf32>
    %511 = arith.addf %508, %510 : vector<8x16xf32>
    %cst_95 = arith.constant 0.000000e+00 : f32
    %512 = vector.broadcast %cst_95 : f32 to vector<8x16xf32>
    %513 = arith.maximumf %511, %512 : vector<8x16xf32>
    %c0_96 = arith.constant 0 : index
    %c0_97 = arith.constant 0 : index
    %514 = vector.load %arg10[%c0_96, %c0_97] : memref<16x128xf32, #tpu.memory_space<vmem>>, vector<16x128xf32>
    %cst_98 = arith.constant dense<0.000000e+00> : vector<8x128xf32>
    %515 = tpu.matmul %513, %514, %cst_98 {dimension_numbers = #tpu.dot_dimension_numbers<[1], [0], [0], [1], [0, 0, 1, 1], [], []>} : vector<8x16xf32>, vector<16x128xf32>, vector<8x128xf32> -> vector<8x128xf32>
    %c0_99 = arith.constant 0 : index
    %c0_100 = arith.constant 0 : index
    %516 = vector.load %arg11[%c0_99, %c0_100] : memref<1x128xf32, #tpu.memory_space<vmem>>, vector<1x128xf32>
    %517 = vector.broadcast %516 : vector<1x128xf32> to vector<8x128xf32>
    %518 = arith.addf %515, %517 : vector<8x128xf32>
    %c0_101 = arith.constant 0 : index
    %c0_102 = arith.constant 0 : index
    %519 = vector.load %arg12[%c0_101, %c0_102] : memref<8x128xf32, #tpu.memory_space<vmem>>, vector<8x128xf32>
    tpu.vector_store %arg12[%c0_101, %c0_102], %518 {strides = array<i32>} : memref<8x128xf32, #tpu.memory_space<vmem>>, vector<8x128xf32>,
    return
  }
  func.func @transform_0(%arg0: i32) -> (i32, i32, i32) {
    %c0_i32 = arith.constant 0 : i32
    %c0_i32_0 = arith.constant 0 : i32
    %c0_i32_1 = arith.constant 0 : i32
    return %c0_i32, %arg0, %c0_i32_0 : i32, i32, i32
  }
  func.func @transform_1(%arg0: i32) -> (i32, i32) {
    %c0_i32 = arith.constant 0 : i32
    %c0_i32_0 = arith.constant 0 : i32
    %c0_i32_1 = arith.constant 0 : i32
    return %c0_i32, %c0_i32_0 : i32, i32
  }
  func.func @transform_2(%arg0: i32) -> (i32, i32) {
    %c0_i32 = arith.constant 0 : i32
    %c0_i32_0 = arith.constant 0 : i32
    %c0_i32_1 = arith.constant 0 : i32
    return %c0_i32, %c0_i32_0 : i32, i32
  }
  func.func @transform_3(%arg0: i32) -> (i32, i32) {
    %c0_i32 = arith.constant 0 : i32
    %c0_i32_0 = arith.constant 0 : i32
    %c0_i32_1 = arith.constant 0 : i32
    return %c0_i32, %c0_i32_0 : i32, i32
  }
  func.func @transform_4(%arg0: i32) -> (i32, i32) {
    %c0_i32 = arith.constant 0 : i32
    %c0_i32_0 = arith.constant 0 : i32
    %c0_i32_1 = arith.constant 0 : i32
    return %c0_i32, %c0_i32_0 : i32, i32
  }
  func.func @transform_5(%arg0: i32) -> (i32, i32) {
    %c0_i32 = arith.constant 0 : i32
    %c0_i32_0 = arith.constant 0 : i32
    %c0_i32_1 = arith.constant 0 : i32
    return %c0_i32, %c0_i32_0 : i32, i32
  }
  func.func @transform_6(%arg0: i32) -> (i32, i32) {
    %c0_i32 = arith.constant 0 : i32
    %c0_i32_0 = arith.constant 0 : i32
    %c0_i32_1 = arith.constant 0 : i32
    return %c0_i32, %c0_i32_0 : i32, i32
  }
  func.func @transform_7(%arg0: i32) -> (i32, i32) {
    %c0_i32 = arith.constant 0 : i32
    %c0_i32_0 = arith.constant 0 : i32
    %c0_i32_1 = arith.constant 0 : i32
    return %c0_i32, %c0_i32_0 : i32, i32
  }
  func.func @transform_8(%arg0: i32) -> (i32, i32) {
    %c0_i32 = arith.constant 0 : i32
    %c0_i32_0 = arith.constant 0 : i32
    %c0_i32_1 = arith.constant 0 : i32
    return %c0_i32, %c0_i32_0 : i32, i32
  }
  func.func @transform_9(%arg0: i32) -> (i32, i32) {
    %c0_i32 = arith.constant 0 : i32
    %c0_i32_0 = arith.constant 0 : i32
    %c0_i32_1 = arith.constant 0 : i32
    return %c0_i32, %c0_i32_0 : i32, i32
  }
  func.func @transform_10(%arg0: i32) -> (i32, i32) {
    %c0_i32 = arith.constant 0 : i32
    %c0_i32_0 = arith.constant 0 : i32
    %c0_i32_1 = arith.constant 0 : i32
    return %c0_i32, %c0_i32_0 : i32, i32
  }
  func.func @transform_11(%arg0: i32) -> (i32, i32) {
    %c0_i32 = arith.constant 0 : i32
    %c0_i32_0 = arith.constant 0 : i32
    return %arg0, %c0_i32 : i32, i32
  }
}

</mosaic_0001>

<llo_original>
// kernel: ts_rnn_forward.1
$region0: #{ts_rnn_forward.1}
  #allocation0 [shape = 'u32[]', space=smem, size = 0x4, offset = 0x4, fixed_abs, tag = 'smem constant byte address 0x4 - core index']
  #allocation1 [shape = 'u32[144,128]{1,0:T(1,128)}', space=vmem, size = 0x12000, scoped, tag = 'internal scratch']
  %s0 = inlined_call_operand.vmem [shape: f32[8,8,13], index: 0, kind: input, shape index: {}]
  %s1 = inlined_call_operand.hbm [shape: bf16[13,256], index: 1, kind: input, shape index: {}]
  %s2 = inlined_call_operand.vmem [shape: bf16[64,256], index: 2, kind: input, shape index: {}]
  %s3 = inlined_call_operand.hbm [shape: f32[1,256], index: 3, kind: input, shape index: {}]
  %s4 = inlined_call_operand.vmem [shape: bf16[64,256], index: 4, kind: input, shape index: {}]
  %s5 = inlined_call_operand.vmem [shape: bf16[64,256], index: 5, kind: input, shape index: {}]
  %s6 = inlined_call_operand.vmem [shape: f32[1,256], index: 6, kind: input, shape index: {}]
  %s7 = inlined_call_operand.vmem [shape: f32[64,16], index: 7, kind: input, shape index: {}]
  %s8 = inlined_call_operand.vmem [shape: f32[1,16], index: 8, kind: input, shape index: {}]
  %s9 = inlined_call_operand.vmem [shape: f32[16,128], index: 9, kind: input, shape index: {}]
  %s10 = inlined_call_operand.vmem [shape: f32[1,128], index: 10, kind: input, shape index: {}]
  %s11 = inlined_call_operand.vmem [shape: f32[8,128], index: 11, kind: output, shape index: {}]
  %s12 = sld [smem:[#allocation0]]
  $region62: #{ts_rnn_forward.1} parent=0
    _
  %s14 = ssub.s32 1, %s12
  %s15 = scalar_select 0, %s14, %s12
  $region1: #{ts_rnn_forward.1} parent=0
    #allocation2 [shape = 'u8[8192]{0}', space=vmem, size = 0x2000, scoped, tag = 'input window, operand 1, single buffered']
    #allocation3 [shape = 's32[1]{0}', space=sflag, size = 0x4, scoped, tag = 'scoped memory for ts_rnn_forward.1']
    #allocation4 [shape = 'u8[1024]{0}', space=vmem, size = 0x400, scoped, tag = 'input window, operand 3, single buffered']
    #allocation5 [shape = 's32[1]{0}', space=sflag, size = 0x4, scoped, tag = 'scoped memory for ts_rnn_forward.1']
    %16 = vsyncpa [#allocation3], 0
    %17 = vsyncpa [#allocation5], 0
    // Predicated region
    $region2: #{ts_rnn_forward.1} parent=1 // pred_check
      _
    $region3: #{ts_rnn_forward.1} parent=1 // pred_check_branch
      %19 = sbr.rel (0) target = $region5
    $region4: #{ts_rnn_forward.1} parent=1 // pred_region
      _
    $region5: #{ts_rnn_forward.1} parent=1 // pred_fallthru
      _
    // Predicated region
    $region6: #{ts_rnn_forward.1} parent=1 // pred_check
      _
    $region7: #{ts_rnn_forward.1} parent=1 // pred_check_branch
      %21 = sbr.rel (0) target = $region9
    $region8: #{ts_rnn_forward.1} parent=1 // pred_region
      %s23 = ssub.s32 256, 256
      %24 = vsyncadd [#allocation3], %s23
      %s25 = sshll.u32 [#allocation2], 4
      %s26 = int_to_ptr.vmem [resolvable:$true] %s25
      %31 = dma.hbm_to_vmem [thread:$0]  %s1, 256, %s26, [#allocation3], 128, 128, 8
    $region9: #{ts_rnn_forward.1} parent=1 // pred_fallthru
      _
    // Predicated region
    $region10: #{ts_rnn_forward.1} parent=1 // pred_check
      _
    $region11: #{ts_rnn_forward.1} parent=1 // pred_check_branch
      %33 = sbr.rel (0) target = $region13
    $region12: #{ts_rnn_forward.1} parent=1 // pred_region
      _
    $region13: #{ts_rnn_forward.1} parent=1 // pred_fallthru
      _
    // Predicated region
    $region14: #{ts_rnn_forward.1} parent=1 // pred_check
      _
    $region15: #{ts_rnn_forward.1} parent=1 // pred_check_branch
      %35 = sbr.rel (0) target = $region17
    $region16: #{ts_rnn_forward.1} parent=1 // pred_region
      %s37 = ssub.s32 32, 32
      %38 = vsyncadd [#allocation5], %s37
      %s40 = sshll.u32 [#allocation4], 4
      %s41 = int_to_ptr.vmem [resolvable:$true] %s40
      %43 = dma.hbm_to_vmem [thread:$0]  %s3, 32, %s41, [#allocation5]
    $region17: #{ts_rnn_forward.1} parent=1 // pred_fallthru
      _
    // Predicated region
    $region18: #{ts_rnn_forward.1} parent=1 // pred_check
      _
    $region19: #{ts_rnn_forward.1} parent=1 // pred_check_branch
      %45 = sbr.rel (0) target = $region21
    $region20: #{ts_rnn_forward.1} parent=1 // pred_region
      _
    $region21: #{ts_rnn_forward.1} parent=1 // pred_fallthru
      _
    // Predicated region
    $region22: #{ts_rnn_forward.1} parent=1 // pred_check
      _
    $region23: #{ts_rnn_forward.1} parent=1 // pred_check_branch
      %47 = sbr.rel (0) target = $region25
    $region24: #{ts_rnn_forward.1} parent=1 // pred_region
      _
    $region25: #{ts_rnn_forward.1} parent=1 // pred_fallthru
      _
    // Predicated region
    $region26: #{ts_rnn_forward.1} parent=1 // pred_check
      _
    $region27: #{ts_rnn_forward.1} parent=1 // pred_check_branch
      %49 = sbr.rel (0) target = $region29
    $region28: #{ts_rnn_forward.1} parent=1 // pred_region
      _
    $region29: #{ts_rnn_forward.1} parent=1 // pred_fallthru
      _
    // Predicated region
    $region30: #{ts_rnn_forward.1} parent=1 // pred_check
      _
    $region31: #{ts_rnn_forward.1} parent=1 // pred_check_branch
      %51 = sbr.rel (0) target = $region33
    $region32: #{ts_rnn_forward.1} parent=1 // pred_region
      _
    $region33: #{ts_rnn_forward.1} parent=1 // pred_fallthru
      _
    // Predicated region
    $region34: #{ts_rnn_forward.1} parent=1 // pred_check
      _
    $region35: #{ts_rnn_forward.1} parent=1 // pred_check_branch
      %53 = sbr.rel (0) target = $region37
    $region36: #{ts_rnn_forward.1} parent=1 // pred_region
      _
    $region37: #{ts_rnn_forward.1} parent=1 // pred_fallthru
      _
    // Predicated region
    $region38: #{ts_rnn_forward.1} parent=1 // pred_check
      _
    $region39: #{ts_rnn_forward.1} parent=1 // pred_check_branch
      %55 = sbr.rel (0) target = $region41
    $region40: #{ts_rnn_forward.1} parent=1 // pred_region
      _
    $region41: #{ts_rnn_forward.1} parent=1 // pred_fallthru
      _
    // Predicated region
    $region42: #{ts_rnn_forward.1} parent=1 // pred_check
      _
    $region43: #{ts_rnn_forward.1} parent=1 // pred_check_branch
      %57 = sbr.rel (0) target = $region45
    $region44: #{ts_rnn_forward.1} parent=1 // pred_region
      _
    $region45: #{ts_rnn_forward.1} parent=1 // pred_fallthru
      _
    // Predicated region
    $region46: #{ts_rnn_forward.1} parent=1 // pred_check
      _
    $region47: #{ts_rnn_forward.1} parent=1 // pred_check_branch
      %59 = sbr.rel (0) target = $region49
    $region48: #{ts_rnn_forward.1} parent=1 // pred_region
      %60 = dma.done [#allocation3], 256
    $region49: #{ts_rnn_forward.1} parent=1 // pred_fallthru
      _
    // Predicated region
    $region50: #{ts_rnn_forward.1} parent=1 // pred_check
      _
    $region51: #{ts_rnn_forward.1} parent=1 // pred_check_branch
      %62 = sbr.rel (0) target = $region53
    $region52: #{ts_rnn_forward.1} parent=1 // pred_region
      %63 = dma.done [#allocation5], 32
    $region53: #{ts_rnn_forward.1} parent=1 // pred_fallthru
      _
    %v65 = vld [vmem:[%s0] sm:$0xff]
    %v66 = vld [vmem:[%s0 + $0x8] sm:$0xff]
    %v67 = vld [vmem:[%s0 + $0x10] sm:$0xff]
    %v68 = vld [vmem:[%s0 + $0x18] sm:$0xff]
    %v69 = vld [vmem:[%s0 + $0x20] sm:$0xff]
    %v70 = vld [vmem:[%s0 + $0x28] sm:$0xff]
    %v71 = vld [vmem:[%s0 + $0x30] sm:$0xff]
    %v72 = vld [vmem:[%s0 + $0x38] sm:$0xff]
    %v73 = vpack.c.bf16 %v66, %v65
    %v74 = vpack.c.bf16 %v68, %v67
    %v75 = vpack.c.bf16 %v70, %v69
    %v76 = vpack.c.bf16 %v72, %v71
    %v77 = vld [vmem:[#allocation2] sm:$0xff]
    %v78 = vld [vmem:[#allocation2 + $0x8] sm:$0x77]
    %v79 = vld [vmem:[#allocation4] sm:$0x3]
    %v81 = vlaneseq
    %v82 = vshrl.u32 %v81, 7
    %v83 = vsub.s32 0, %v82
    %v84 = vrot.slane %v79, %v83
    %v85 = vlaneseq
    %v86 = vshrl.u32 %v85, 7
    %v87 = vsub.s32 1, %v86
    %v88 = vrot.slane %v79, %v87
    %v93 = vunpack.c.l.b16 %v77
    %v94 = vunpack.c.h.b16 %v77
    %v95 = vunpack.c.l.b16 %v78
    %v96 = vunpack.c.h.b16 %v78
    %v97 = vpack.c.b16 %v95, %v93
    %v98 = vpack.c.b16 %v96, %v94
    %vm99 = vcmask 105472
    %v101 = vsel %vm99, %v73, 0
    %v104 = vsel %vm99, %v74, 0
    %v107 = vsel %vm99, %v75, 0
    %v110 = vsel %vm99, %v76, 0
    %vm112 = vcmask 1045504
    %vm113 = vcmask 1046528
    %v114 = vsel %vm112, 4294967295, 65535
    %v115 = vsel %vm113, %v114, 0
    %v117 = vand.u32 %v97, %v115
    %v120 = vand.u32 %v98, %v115
    %122 = vmatprep.subr.bf16.mxu0 %v120
    %123 = vmatpush1.bf16.msra.mxu0 %v117
    %124 = vmatprep.subr.bf16.mxu0 0
    %125 = vmatpush1.bf16.msra.mxu0 0
    %126 = vmatprep.subr.bf16.mxu0 0
    %127 = vmatpush1.bf16.msra.mxu0 0
    %128 = vmatprep.subr.bf16.mxu0 0
    %129 = vmatpush1.bf16.msra.mxu0 0
    %130 = vmatprep.subr.bf16.mxu0 0
    %131 = vmatpush1.bf16.msra.mxu0 0
    %132 = vmatprep.subr.bf16.mxu0 0
    %133 = vmatpush1.bf16.msra.mxu0 0
    %134 = vmatprep.subr.bf16.mxu0 0
    %135 = vmatpush1.bf16.msra.mxu0 0
    %136 = vmatprep.subr.bf16.mxu0 0
    %137 = vmatpush1.bf16.msra.mxu0 0
    %138 = vmatprep.subr.bf16.mxu0 0
    %139 = vmatpush1.bf16.msra.mxu0 0
    %140 = vmatprep.subr.bf16.mxu0 0
    %141 = vmatpush1.bf16.msra.mxu0 0
    %142 = vmatprep.subr.bf16.mxu0 0
    %143 = vmatpush1.bf16.msra.mxu0 0
    %144 = vmatprep.subr.bf16.mxu0 0
    %145 = vmatpush1.bf16.msra.mxu0 0
    %146 = vmatprep.subr.bf16.mxu0 0
    %147 = vmatpush1.bf16.msra.mxu0 0
    %148 = vmatprep.subr.bf16.mxu0 0
    %149 = vmatpush1.bf16.msra.mxu0 0
    %150 = vmatprep.subr.bf16.mxu0 0
    %151 = vmatpush1.bf16.msra.mxu0 0
    %152 = vmatprep.subr.bf16.mxu0 0
    %153 = vmatpush1.bf16.msra.mxu0 0
    %154 = vmatprep.mubr.bf16.mxu0 0
    %155 = vmatmul.mubr.bf16.gmra.mrb[0].mxu0 %v101
    %v156 = vpop.f32.mrb[0].mxu0
    %v157 = vadd.f32 %v84, %v156
    %v158 = vpop.f32.mrb[0].mxu0
    %v159 = vadd.f32 %v88, %v158
    %v160 = vpop.f32.mrb[0].mxu0
    %v161 = vadd.f32 %v84, %v160
    %v162 = vpop.f32.mrb[0].mxu0
    %v163 = vadd.f32 %v88, %v162
    %164 = vmatprep.mubr.bf16.mxu0 0
    %165 = vmatmul.mubr.bf16.gmra.mrb[0].mxu0 %v104
    %v166 = vpop.f32.mrb[0].mxu0
    %v167 = vadd.f32 %v84, %v166
    %v168 = vpop.f32.mrb[0].mxu0
    %v169 = vadd.f32 %v88, %v168
    %v170 = vpop.f32.mrb[0].mxu0
    %v171 = vadd.f32 %v84, %v170
    %v172 = vpop.f32.mrb[0].mxu0
    %v173 = vadd.f32 %v88, %v172
    %174 = vmatprep.mubr.bf16.mxu0 0
    %175 = vmatmul.mubr.bf16.gmra.mrb[0].mxu0 %v107
    %v176 = vpop.f32.mrb[0].mxu0
    %v177 = vadd.f32 %v84, %v176
    %v178 = vpop.f32.mrb[0].mxu0
    %v179 = vadd.f32 %v88, %v178
    %v180 = vpop.f32.mrb[0].mxu0
    %v181 = vadd.f32 %v84, %v180
    %v182 = vpop.f32.mrb[0].mxu0
    %v183 = vadd.f32 %v88, %v182
    %184 = vmatprep.mubr.bf16.mxu0 0
    %185 = vmatmul.mubr.bf16.gmra.mrb[0].mxu0 %v110
    %v186 = vpop.f32.mrb[0].mxu0
    %v187 = vadd.f32 %v84, %v186
    %v188 = vpop.f32.mrb[0].mxu0
    %v189 = vadd.f32 %v88, %v188
    %v190 = vpop.f32.mrb[0].mxu0
    %v191 = vadd.f32 %v84, %v190
    %v192 = vpop.f32.mrb[0].mxu0
    %v193 = vadd.f32 %v88, %v192
    %194 = vdwg.mxu0
    %v195 = vld [vmem:[%s2] sm:$0xff]
    %v196 = vld [vmem:[%s2 + $0x8] sm:$0xff]
    %v197 = vld [vmem:[%s2 + $0x10] sm:$0xff]
    %v198 = vld [vmem:[%s2 + $0x18] sm:$0xff]
    %v199 = vld [vmem:[%s2 + $0x20] sm:$0xff]
    %v200 = vld [vmem:[%s2 + $0x28] sm:$0xff]
    %v201 = vld [vmem:[%s2 + $0x30] sm:$0xff]
    %v202 = vld [vmem:[%s2 + $0x38] sm:$0xff]
    %v203 = vld [vmem:[%s4] sm:$0xff]
    %v204 = vld [vmem:[%s4 + $0x8] sm:$0xff]
    %v205 = vld [vmem:[%s4 + $0x10] sm:$0xff]
    %v206 = vld [vmem:[%s4 + $0x18] sm:$0xff]
    %v207 = vld [vmem:[%s4 + $0x20] sm:$0xff]
    %v208 = vld [vmem:[%s4 + $0x28] sm:$0xff]
    %v209 = vld [vmem:[%s4 + $0x30] sm:$0xff]
    %v210 = vld [vmem:[%s4 + $0x38] sm:$0xff]
    %v211 = vld [vmem:[%s5] sm:$0xff]
    %v212 = vld [vmem:[%s5 + $0x8] sm:$0xff]
    %v213 = vld [vmem:[%s5 + $0x10] sm:$0xff]
    %v214 = vld [vmem:[%s5 + $0x18] sm:$0xff]
    %v215 = vld [vmem:[%s5 + $0x20] sm:$0xff]
    %v216 = vld [vmem:[%s5 + $0x28] sm:$0xff]
    %v217 = vld [vmem:[%s5 + $0x30] sm:$0xff]
    %v218 = vld [vmem:[%s5 + $0x38] sm:$0xff]
    %v219 = vld [vmem:[%s6] sm:$0x3]
    %v221 = vlaneseq
    %v222 = vshrl.u32 %v221, 7
    %v223 = vsub.s32 0, %v222
    %v224 = vrot.slane %v219, %v223
    %v225 = vlaneseq
    %v226 = vshrl.u32 %v225, 7
    %v227 = vsub.s32 1, %v226
    %v228 = vrot.slane %v219, %v227
    %v239 = vunpack.c.l.b16 %v195
    %v240 = vunpack.c.h.b16 %v195
    %v241 = vunpack.c.l.b16 %v196
    %v242 = vunpack.c.h.b16 %v196
    %v243 = vunpack.c.l.b16 %v197
    %v244 = vunpack.c.h.b16 %v197
    %v245 = vunpack.c.l.b16 %v198
    %v246 = vunpack.c.h.b16 %v198
    %v247 = vunpack.c.l.b16 %v199
    %v248 = vunpack.c.h.b16 %v199
    %v249 = vunpack.c.l.b16 %v200
    %v250 = vunpack.c.h.b16 %v200
    %v251 = vunpack.c.l.b16 %v201
    %v252 = vunpack.c.h.b16 %v201
    %v253 = vunpack.c.l.b16 %v202
    %v254 = vunpack.c.h.b16 %v202
    %v255 = vpack.c.b16 %v241, %v239
    %v256 = vpack.c.b16 %v242, %v240
    %v257 = vpack.c.b16 %v245, %v243
    %v258 = vpack.c.b16 %v246, %v244
    %v259 = vpack.c.b16 %v249, %v247
    %v260 = vpack.c.b16 %v250, %v248
    %v261 = vpack.c.b16 %v253, %v251
    %v262 = vpack.c.b16 %v254, %v252
    %vm271 = vcmask 523264
    %v273 = vsel %vm271, 0, 0
    %275 = vmatprep.subr.bf16.mxu0 %v256
    %276 = vmatpush1.bf16.msra.mxu0 %v255
    %277 = vmatprep.subr.bf16.mxu0 %v258
    %278 = vmatpush1.bf16.msra.mxu0 %v257
    %279 = vmatprep.subr.bf16.mxu0 %v260
    %280 = vmatpush1.bf16.msra.mxu0 %v259
    %281 = vmatprep.subr.bf16.mxu0 %v262
    %282 = vmatpush1.bf16.msra.mxu0 %v261
    %283 = vmatprep.subr.bf16.mxu0 0
    %284 = vmatpush1.bf16.msra.mxu0 0
    %285 = vmatprep.subr.bf16.mxu0 0
    %286 = vmatpush1.bf16.msra.mxu0 0
    %287 = vmatprep.subr.bf16.mxu0 0
    %288 = vmatpush1.bf16.msra.mxu0 0
    %289 = vmatprep.subr.bf16.mxu0 0
    %290 = vmatpush1.bf16.msra.mxu0 0
    %291 = vmatprep.subr.bf16.mxu0 0
    %292 = vmatpush1.bf16.msra.mxu0 0
    %293 = vmatprep.subr.bf16.mxu0 0
    %294 = vmatpush1.bf16.msra.mxu0 0
    %295 = vmatprep.subr.bf16.mxu0 0
    %296 = vmatpush1.bf16.msra.mxu0 0
    %297 = vmatprep.subr.bf16.mxu0 0
    %298 = vmatpush1.bf16.msra.mxu0 0
    %299 = vmatprep.subr.bf16.mxu0 0
    %300 = vmatpush1.bf16.msra.mxu0 0
    %301 = vmatprep.subr.bf16.mxu0 0
    %302 = vmatpush1.bf16.msra.mxu0 0
    %303 = vmatprep.subr.bf16.mxu0 0
    %304 = vmatpush1.bf16.msra.mxu0 0
    %305 = vmatprep.subr.bf16.mxu0 0
    %306 = vmatpush1.bf16.msra.mxu0 0
    %307 = vmatprep.mubr.bf16.mxu0 0
    %308 = vmatmul.mubr.bf16.gmra.mrb[0].mxu0 %v273
    %v309 = vpop.f32.mrb[0].mxu0
    %v310 = vadd.f32 0.0, %v309
    %v311 = vpop.f32.mrb[0].mxu0
    %v312 = vadd.f32 0.0, %v311
    %v313 = vpop.f32.mrb[0].mxu0
    %v314 = vpop.f32.mrb[0].mxu0
    %315 = vdwg.mxu0
    %v316 = vadd.f32 %v157, %v310
    %v317 = vadd.f32 %v159, %v312
    %v318 = vxor.u32 %v316, 2147483648
    %v319 = vmul.f32 %v318, 1.442695
    %v320 = vpow.pop %v319
    %v321 = vadd.f32 %v320, 1.0
    %v322 = vrcp.pop %v321
    %v323 = vmul.f32 1.0, %v322
    %v324 = vxor.u32 %v317, 2147483648
    %v325 = vmul.f32 %v324, 1.442695
    %v326 = vpow.pop %v325
    %v327 = vadd.f32 %v326, 1.0
    %v328 = vrcp.pop %v327
    %v329 = vmul.f32 1.0, %v328
    %v330 = vtanh.pop %v317
    %v331 = vmul.f32 %v323, 0.0
    %v332 = vmul.f32 %v323, %v330
    %334 = vrot.lane.b32.xlu0 %v332, 64
    %v335 = vpop.permute.xlu0 %334
    %v337 = vadd.f32 %v331, %v335
    %v338 = vtanh.pop %v337
    %v339 = vmul.f32 %v329, %v338
    %v340 = vpack.c.bf16 %v339, %v339
    %v349 = vunpack.c.l.b16 %v211
    %v350 = vunpack.c.h.b16 %v211
    %v351 = vunpack.c.l.b16 %v212
    %v352 = vunpack.c.h.b16 %v212
    %v353 = vunpack.c.l.b16 %v213
    %v354 = vunpack.c.h.b16 %v213
    %v355 = vunpack.c.l.b16 %v214
    %v356 = vunpack.c.h.b16 %v214
    %v357 = vunpack.c.l.b16 %v215
    %v358 = vunpack.c.h.b16 %v215
    %v359 = vunpack.c.l.b16 %v216
    %v360 = vunpack.c.h.b16 %v216
    %v361 = vunpack.c.l.b16 %v217
    %v362 = vunpack.c.h.b16 %v217
    %v363 = vunpack.c.l.b16 %v218
    %v364 = vunpack.c.h.b16 %v218
    %v365 = vpack.c.b16 %v351, %v349
    %v366 = vpack.c.b16 %v352, %v350
    %v367 = vpack.c.b16 %v355, %v353
    %v368 = vpack.c.b16 %v356, %v354
    %v369 = vpack.c.b16 %v359, %v357
    %v370 = vpack.c.b16 %v360, %v358
    %v371 = vpack.c.b16 %v363, %v361
    %v372 = vpack.c.b16 %v364, %v362
    %381 = vmatprep.subr.bf16.mxu0 %v366
    %382 = vmatpush1.bf16.msra.mxu0 %v365
    %383 = vmatprep.subr.bf16.mxu0 %v368
    %384 = vmatpush1.bf16.msra.mxu0 %v367
    %385 = vmatprep.subr.bf16.mxu0 %v370
    %386 = vmatpush1.bf16.msra.mxu0 %v369
    %387 = vmatprep.subr.bf16.mxu0 %v372
    %388 = vmatpush1.bf16.msra.mxu0 %v371
    %389 = vmatprep.subr.bf16.mxu0 0
    %390 = vmatpush1.bf16.msra.mxu0 0
    %391 = vmatprep.subr.bf16.mxu0 0
    %392 = vmatpush1.bf16.msra.mxu0 0
    %393 = vmatprep.subr.bf16.mxu0 0
    %394 = vmatpush1.bf16.msra.mxu0 0
    %395 = vmatprep.subr.bf16.mxu0 0
    %396 = vmatpush1.bf16.msra.mxu0 0
    %397 = vmatprep.subr.bf16.mxu0 0
    %398 = vmatpush1.bf16.msra.mxu0 0
    %399 = vmatprep.subr.bf16.mxu0 0
    %400 = vmatpush1.bf16.msra.mxu0 0
    %401 = vmatprep.subr.bf16.mxu0 0
    %402 = vmatpush1.bf16.msra.mxu0 0
    %403 = vmatprep.subr.bf16.mxu0 0
    %404 = vmatpush1.bf16.msra.mxu0 0
    %405 = vmatprep.subr.bf16.mxu0 0
    %406 = vmatpush1.bf16.msra.mxu0 0
    %407 = vmatprep.subr.bf16.mxu0 0
    %408 = vmatpush1.bf16.msra.mxu0 0
    %409 = vmatprep.subr.bf16.mxu0 0
    %410 = vmatpush1.bf16.msra.mxu0 0
    %411 = vmatprep.subr.bf16.mxu0 0
    %412 = vmatpush1.bf16.msra.mxu0 0
    %413 = vmatprep.mubr.bf16.mxu0 0
    %414 = vmatmul.mubr.bf16.gmra.mrb[0].mxu0 %v273
    %v415 = vpop.f32.mrb[0].mxu0
    %v416 = vadd.f32 0.0, %v415
    %v417 = vpop.f32.mrb[0].mxu0
    %v418 = vadd.f32 0.0, %v417
    %v419 = vpop.f32.mrb[0].mxu0
    %v420 = vpop.f32.mrb[0].mxu0
    %421 = vdwg.mxu0
    %v430 = vunpack.c.l.b16 %v203
    %v431 = vunpack.c.h.b16 %v203
    %v432 = vunpack.c.l.b16 %v204
    %v433 = vunpack.c.h.b16 %v204
    %v434 = vunpack.c.l.b16 %v205
    %v435 = vunpack.c.h.b16 %v205
    %v436 = vunpack.c.l.b16 %v206
    %v437 = vunpack.c.h.b16 %v206
    %v438 = vunpack.c.l.b16 %v207
    %v439 = vunpack.c.h.b16 %v207
    %v440 = vunpack.c.l.b16 %v208
    %v441 = vunpack.c.h.b16 %v208
    %v442 = vunpack.c.l.b16 %v209
    %v443 = vunpack.c.h.b16 %v209
    %v444 = vunpack.c.l.b16 %v210
    %v445 = vunpack.c.h.b16 %v210
    %v446 = vpack.c.b16 %v432, %v430
    %v447 = vpack.c.b16 %v433, %v431
    %v448 = vpack.c.b16 %v436, %v434
    %v449 = vpack.c.b16 %v437, %v435
    %v450 = vpack.c.b16 %v440, %v438
    %v451 = vpack.c.b16 %v441, %v439
    %v452 = vpack.c.b16 %v444, %v442
    %v453 = vpack.c.b16 %v445, %v443
    %v463 = vsel %vm271, %v340, 0
    %465 = vmatprep.subr.bf16.mxu0 %v447
    %466 = vmatpush1.bf16.msra.mxu0 %v446
    %467 = vmatprep.subr.bf16.mxu0 %v449
    %468 = vmatpush1.bf16.msra.mxu0 %v448
    %469 = vmatprep.subr.bf16.mxu0 %v451
    %470 = vmatpush1.bf16.msra.mxu0 %v450
    %471 = vmatprep.subr.bf16.mxu0 %v453
    %472 = vmatpush1.bf16.msra.mxu0 %v452
    %473 = vmatprep.subr.bf16.mxu0 0
    %474 = vmatpush1.bf16.msra.mxu0 0
    %475 = vmatprep.subr.bf16.mxu0 0
    %476 = vmatpush1.bf16.msra.mxu0 0
    %477 = vmatprep.subr.bf16.mxu0 0
    %478 = vmatpush1.bf16.msra.mxu0 0
    %479 = vmatprep.subr.bf16.mxu0 0
    %480 = vmatpush1.bf16.msra.mxu0 0
    %481 = vmatprep.subr.bf16.mxu0 0
    %482 = vmatpush1.bf16.msra.mxu0 0
    %483 = vmatprep.subr.bf16.mxu0 0
    %484 = vmatpush1.bf16.msra.mxu0 0
    %485 = vmatprep.subr.bf16.mxu0 0
    %486 = vmatpush1.bf16.msra.mxu0 0
    %487 = vmatprep.subr.bf16.mxu0 0
    %488 = vmatpush1.bf16.msra.mxu0 0
    %489 = vmatprep.subr.bf16.mxu0 0
    %490 = vmatpush1.bf16.msra.mxu0 0
    %491 = vmatprep.subr.bf16.mxu0 0
    %492 = vmatpush1.bf16.msra.mxu0 0
    %493 = vmatprep.subr.bf16.mxu0 0
    %494 = vmatpush1.bf16.msra.mxu0 0
    %495 = vmatprep.subr.bf16.mxu0 0
    %496 = vmatpush1.bf16.msra.mxu0 0
    %497 = vmatprep.mubr.bf16.mxu0 0
    %498 = vmatmul.mubr.bf16.gmra.mrb[0].mxu0 %v463
    %v499 = vpop.f32.mrb[0].mxu0
    %v500 = vadd.f32 %v416, %v499
    %v501 = vpop.f32.mrb[0].mxu0
    %v502 = vadd.f32 %v418, %v501
    %v503 = vpop.f32.mrb[0].mxu0
    %v504 = vpop.f32.mrb[0].mxu0
    %505 = vdwg.mxu0
    %v506 = vadd.f32 %v500, %v224
    %v507 = vadd.f32 %v502, %v228
    %v508 = vxor.u32 %v506, 2147483648
    %v509 = vmul.f32 %v508, 1.442695
    %v510 = vpow.pop %v509
    %v511 = vadd.f32 %v510, 1.0
    %v512 = vrcp.pop %v511
    %v513 = vmul.f32 1.0, %v512
    %v514 = vxor.u32 %v507, 2147483648
    %v515 = vmul.f32 %v514, 1.442695
    %v516 = vpow.pop %v515
    %v517 = vadd.f32 %v516, 1.0
    %v518 = vrcp.pop %v517
    %v519 = vmul.f32 1.0, %v518
    %v520 = vtanh.pop %v507
    %v521 = vmul.f32 %v513, 0.0
    %v522 = vmul.f32 %v513, %v520
    %524 = vrot.lane.b32.xlu0 %v522, 64
    %v525 = vpop.permute.xlu0 %524
    %v527 = vadd.f32 %v521, %v525
    %v528 = vtanh.pop %v527
    %v529 = vmul.f32 %v519, %v528
    %530 = vmatprep.subr.bf16.mxu0 %v256
    %531 = vmatpush1.bf16.msra.mxu0 %v255
    %532 = vmatprep.subr.bf16.mxu0 %v258
    %533 = vmatpush1.bf16.msra.mxu0 %v257
    %534 = vmatprep.subr.bf16.mxu0 %v260
    %535 = vmatpush1.bf16.msra.mxu0 %v259
    %536 = vmatprep.subr.bf16.mxu0 %v262
    %537 = vmatpush1.bf16.msra.mxu0 %v261
    %538 = vmatprep.subr.bf16.mxu0 0
    %539 = vmatpush1.bf16.msra.mxu0 0
    %540 = vmatprep.subr.bf16.mxu0 0
    %541 = vmatpush1.bf16.msra.mxu0 0
    %542 = vmatprep.subr.bf16.mxu0 0
    %543 = vmatpush1.bf16.msra.mxu0 0
    %544 = vmatprep.subr.bf16.mxu0 0
    %545 = vmatpush1.bf16.msra.mxu0 0
    %546 = vmatprep.subr.bf16.mxu0 0
    %547 = vmatpush1.bf16.msra.mxu0 0
    %548 = vmatprep.subr.bf16.mxu0 0
    %549 = vmatpush1.bf16.msra.mxu0 0
    %550 = vmatprep.subr.bf16.mxu0 0
    %551 = vmatpush1.bf16.msra.mxu0 0
    %552 = vmatprep.subr.bf16.mxu0 0
    %553 = vmatpush1.bf16.msra.mxu0 0
    %554 = vmatprep.subr.bf16.mxu0 0
    %555 = vmatpush1.bf16.msra.mxu0 0
    %556 = vmatprep.subr.bf16.mxu0 0
    %557 = vmatpush1.bf16.msra.mxu0 0
    %558 = vmatprep.subr.bf16.mxu0 0
    %559 = vmatpush1.bf16.msra.mxu0 0
    %560 = vmatprep.subr.bf16.mxu0 0
    %561 = vmatpush1.bf16.msra.mxu0 0
    %562 = vmatprep.mubr.bf16.mxu0 0
    %563 = vmatmul.mubr.bf16.gmra.mrb[0].mxu0 %v463
    %v564 = vpop.f32.mrb[0].mxu0
    %v565 = vadd.f32 0.0, %v564
    %v566 = vpop.f32.mrb[0].mxu0
    %v567 = vadd.f32 0.0, %v566
    %v568 = vpop.f32.mrb[0].mxu0
    %v569 = vpop.f32.mrb[0].mxu0
    %570 = vdwg.mxu0
    %v571 = vadd.f32 %v161, %v565
    %v572 = vadd.f32 %v163, %v567
    %v573 = vxor.u32 %v571, 2147483648
    %v574 = vmul.f32 %v573, 1.442695
    %v575 = vpow.pop %v574
    %v576 = vadd.f32 %v575, 1.0
    %v577 = vrcp.pop %v576
    %v578 = vmul.f32 1.0, %v577
    %v579 = vxor.u32 %v572, 2147483648
    %v580 = vmul.f32 %v579, 1.442695
    %v581 = vpow.pop %v580
    %v582 = vadd.f32 %v581, 1.0
    %v583 = vrcp.pop %v582
    %v584 = vmul.f32 1.0, %v583
    %v585 = vtanh.pop %v572
    %v586 = vmul.f32 %v578, %v337
    %v587 = vmul.f32 %v578, %v585
    %589 = vrot.lane.b32.xlu0 %v587, 64
    %v590 = vpop.permute.xlu0 %589
    %v592 = vadd.f32 %v586, %v590
    %v593 = vtanh.pop %v592
    %v594 = vmul.f32 %v584, %v593
    %v595 = vpack.c.bf16 %v594, %v594
    %v596 = vpack.c.bf16 %v529, %v529
    %v598 = vsel %vm271, %v596, 0
    %600 = vmatprep.subr.bf16.mxu0 %v366
    %601 = vmatpush1.bf16.msra.mxu0 %v365
    %602 = vmatprep.subr.bf16.mxu0 %v368
    %603 = vmatpush1.bf16.msra.mxu0 %v367
    %604 = vmatprep.subr.bf16.mxu0 %v370
    %605 = vmatpush1.bf16.msra.mxu0 %v369
    %606 = vmatprep.subr.bf16.mxu0 %v372
    %607 = vmatpush1.bf16.msra.mxu0 %v371
    %608 = vmatprep.subr.bf16.mxu0 0
    %609 = vmatpush1.bf16.msra.mxu0 0
    %610 = vmatprep.subr.bf16.mxu0 0
    %611 = vmatpush1.bf16.msra.mxu0 0
    %612 = vmatprep.subr.bf16.mxu0 0
    %613 = vmatpush1.bf16.msra.mxu0 0
    %614 = vmatprep.subr.bf16.mxu0 0
    %615 = vmatpush1.bf16.msra.mxu0 0
    %616 = vmatprep.subr.bf16.mxu0 0
    %617 = vmatpush1.bf16.msra.mxu0 0
    %618 = vmatprep.subr.bf16.mxu0 0
    %619 = vmatpush1.bf16.msra.mxu0 0
    %620 = vmatprep.subr.bf16.mxu0 0
    %621 = vmatpush1.bf16.msra.mxu0 0
    %622 = vmatprep.subr.bf16.mxu0 0
    %623 = vmatpush1.bf16.msra.mxu0 0
    %624 = vmatprep.subr.bf16.mxu0 0
    %625 = vmatpush1.bf16.msra.mxu0 0
    %626 = vmatprep.subr.bf16.mxu0 0
    %627 = vmatpush1.bf16.msra.mxu0 0
    %628 = vmatprep.subr.bf16.mxu0 0
    %629 = vmatpush1.bf16.msra.mxu0 0
    %630 = vmatprep.subr.bf16.mxu0 0
    %631 = vmatpush1.bf16.msra.mxu0 0
    %632 = vmatprep.mubr.bf16.mxu0 0
    %633 = vmatmul.mubr.bf16.gmra.mrb[0].mxu0 %v598
    %v634 = vpop.f32.mrb[0].mxu0
    %v635 = vadd.f32 0.0, %v634
    %v636 = vpop.f32.mrb[0].mxu0
    %v637 = vadd.f32 0.0, %v636
    %v638 = vpop.f32.mrb[0].mxu0
    %v639 = vpop.f32.mrb[0].mxu0
    %640 = vdwg.mxu0
    %v642 = vsel %vm271, %v595, 0
    %644 = vmatprep.subr.bf16.mxu0 %v447
    %645 = vmatpush1.bf16.msra.mxu0 %v446
    %646 = vmatprep.subr.bf16.mxu0 %v449
    %647 = vmatpush1.bf16.msra.mxu0 %v448
    %648 = vmatprep.subr.bf16.mxu0 %v451
    %649 = vmatpush1.bf16.msra.mxu0 %v450
    %650 = vmatprep.subr.bf16.mxu0 %v453
    %651 = vmatpush1.bf16.msra.mxu0 %v452
    %652 = vmatprep.subr.bf16.mxu0 0
    %653 = vmatpush1.bf16.msra.mxu0 0
    %654 = vmatprep.subr.bf16.mxu0 0
    %655 = vmatpush1.bf16.msra.mxu0 0
    %656 = vmatprep.subr.bf16.mxu0 0
    %657 = vmatpush1.bf16.msra.mxu0 0
    %658 = vmatprep.subr.bf16.mxu0 0
    %659 = vmatpush1.bf16.msra.mxu0 0
    %660 = vmatprep.subr.bf16.mxu0 0
    %661 = vmatpush1.bf16.msra.mxu0 0
    %662 = vmatprep.subr.bf16.mxu0 0
    %663 = vmatpush1.bf16.msra.mxu0 0
    %664 = vmatprep.subr.bf16.mxu0 0
    %665 = vmatpush1.bf16.msra.mxu0 0
    %666 = vmatprep.subr.bf16.mxu0 0
    %667 = vmatpush1.bf16.msra.mxu0 0
    %668 = vmatprep.subr.bf16.mxu0 0
    %669 = vmatpush1.bf16.msra.mxu0 0
    %670 = vmatprep.subr.bf16.mxu0 0
    %671 = vmatpush1.bf16.msra.mxu0 0
    %672 = vmatprep.subr.bf16.mxu0 0
    %673 = vmatpush1.bf16.msra.mxu0 0
    %674 = vmatprep.subr.bf16.mxu0 0
    %675 = vmatpush1.bf16.msra.mxu0 0
    %676 = vmatprep.mubr.bf16.mxu0 0
    %677 = vmatmul.mubr.bf16.gmra.mrb[0].mxu0 %v642
    %v678 = vpop.f32.mrb[0].mxu0
    %v679 = vadd.f32 %v635, %v678
    %v680 = vpop.f32.mrb[0].mxu0
    %v681 = vadd.f32 %v637, %v680
    %v682 = vpop.f32.mrb[0].mxu0
    %v683 = vpop.f32.mrb[0].mxu0
    %684 = vdwg.mxu0
    %v685 = vadd.f32 %v679, %v224
    %v686 = vadd.f32 %v681, %v228
    %v687 = vxor.u32 %v685, 2147483648
    %v688 = vmul.f32 %v687, 1.442695
    %v689 = vpow.pop %v688
    %v690 = vadd.f32 %v689, 1.0
    %v691 = vrcp.pop %v690
    %v692 = vmul.f32 1.0, %v691
    %v693 = vxor.u32 %v686, 2147483648
    %v694 = vmul.f32 %v693, 1.442695
    %v695 = vpow.pop %v694
    %v696 = vadd.f32 %v695, 1.0
    %v697 = vrcp.pop %v696
    %v698 = vmul.f32 1.0, %v697
    %v699 = vtanh.pop %v686
    %v700 = vmul.f32 %v692, %v527
    %v701 = vmul.f32 %v692, %v699
    %703 = vrot.lane.b32.xlu0 %v701, 64
    %v704 = vpop.permute.xlu0 %703
    %v706 = vadd.f32 %v700, %v704
    %v707 = vtanh.pop %v706
    %v708 = vmul.f32 %v698, %v707
    %709 = vmatprep.subr.bf16.mxu0 %v256
    %710 = vmatpush1.bf16.msra.mxu0 %v255
    %711 = vmatprep.subr.bf16.mxu0 %v258
    %712 = vmatpush1.bf16.msra.mxu0 %v257
    %713 = vmatprep.subr.bf16.mxu0 %v260
    %714 = vmatpush1.bf16.msra.mxu0 %v259
    %715 = vmatprep.subr.bf16.mxu0 %v262
    %716 = vmatpush1.bf16.msra.mxu0 %v261
    %717 = vmatprep.subr.bf16.mxu0 0
    %718 = vmatpush1.bf16.msra.mxu0 0
    %719 = vmatprep.subr.bf16.mxu0 0
    %720 = vmatpush1.bf16.msra.mxu0 0
    %721 = vmatprep.subr.bf16.mxu0 0
    %722 = vmatpush1.bf16.msra.mxu0 0
    %723 = vmatprep.subr.bf16.mxu0 0
    %724 = vmatpush1.bf16.msra.mxu0 0
    %725 = vmatprep.subr.bf16.mxu0 0
    %726 = vmatpush1.bf16.msra.mxu0 0
    %727 = vmatprep.subr.bf16.mxu0 0
    %728 = vmatpush1.bf16.msra.mxu0 0
    %729 = vmatprep.subr.bf16.mxu0 0
    %730 = vmatpush1.bf16.msra.mxu0 0
    %731 = vmatprep.subr.bf16.mxu0 0
    %732 = vmatpush1.bf16.msra.mxu0 0
    %733 = vmatprep.subr.bf16.mxu0 0
    %734 = vmatpush1.bf16.msra.mxu0 0
    %735 = vmatprep.subr.bf16.mxu0 0
    %736 = vmatpush1.bf16.msra.mxu0 0
    %737 = vmatprep.subr.bf16.mxu0 0
    %738 = vmatpush1.bf16.msra.mxu0 0
    %739 = vmatprep.subr.bf16.mxu0 0
    %740 = vmatpush1.bf16.msra.mxu0 0
    %741 = vmatprep.mubr.bf16.mxu0 0
    %742 = vmatmul.mubr.bf16.gmra.mrb[0].mxu0 %v642
    %v743 = vpop.f32.mrb[0].mxu0
    %v744 = vadd.f32 0.0, %v743
    %v745 = vpop.f32.mrb[0].mxu0
    %v746 = vadd.f32 0.0, %v745
    %v747 = vpop.f32.mrb[0].mxu0
    %v748 = vpop.f32.mrb[0].mxu0
    %749 = vdwg.mxu0
    %v750 = vadd.f32 %v167, %v744
    %v751 = vadd.f32 %v169, %v746
    %v752 = vxor.u32 %v750, 2147483648
    %v753 = vmul.f32 %v752, 1.442695
    %v754 = vpow.pop %v753
    %v755 = vadd.f32 %v754, 1.0
    %v756 = vrcp.pop %v755
    %v757 = vmul.f32 1.0, %v756
    %v758 = vxor.u32 %v751, 2147483648
    %v759 = vmul.f32 %v758, 1.442695
    %v760 = vpow.pop %v759
    %v761 = vadd.f32 %v760, 1.0
    %v762 = vrcp.pop %v761
    %v763 = vmul.f32 1.0, %v762
    %v764 = vtanh.pop %v751
    %v765 = vmul.f32 %v757, %v592
    %v766 = vmul.f32 %v757, %v764
    %768 = vrot.lane.b32.xlu0 %v766, 64
    %v769 = vpop.permute.xlu0 %768
    %v771 = vadd.f32 %v765, %v769
    %v772 = vtanh.pop %v771
    %v773 = vmul.f32 %v763, %v772
    %v774 = vpack.c.bf16 %v773, %v773
    %v775 = vpack.c.bf16 %v708, %v708
    %v777 = vsel %vm271, %v775, 0
    %779 = vmatprep.subr.bf16.mxu0 %v366
    %780 = vmatpush1.bf16.msra.mxu0 %v365
    %781 = vmatprep.subr.bf16.mxu0 %v368
    %782 = vmatpush1.bf16.msra.mxu0 %v367
    %783 = vmatprep.subr.bf16.mxu0 %v370
    %784 = vmatpush1.bf16.msra.mxu0 %v369
    %785 = vmatprep.subr.bf16.mxu0 %v372
    %786 = vmatpush1.bf16.msra.mxu0 %v371
    %787 = vmatprep.subr.bf16.mxu0 0
    %788 = vmatpush1.bf16.msra.mxu0 0
    %789 = vmatprep.subr.bf16.mxu0 0
    %790 = vmatpush1.bf16.msra.mxu0 0
    %791 = vmatprep.subr.bf16.mxu0 0
    %792 = vmatpush1.bf16.msra.mxu0 0
    %793 = vmatprep.subr.bf16.mxu0 0
    %794 = vmatpush1.bf16.msra.mxu0 0
    %795 = vmatprep.subr.bf16.mxu0 0
    %796 = vmatpush1.bf16.msra.mxu0 0
    %797 = vmatprep.subr.bf16.mxu0 0
    %798 = vmatpush1.bf16.msra.mxu0 0
    %799 = vmatprep.subr.bf16.mxu0 0
    %800 = vmatpush1.bf16.msra.mxu0 0
    %801 = vmatprep.subr.bf16.mxu0 0
    %802 = vmatpush1.bf16.msra.mxu0 0
    %803 = vmatprep.subr.bf16.mxu0 0
    %804 = vmatpush1.bf16.msra.mxu0 0
    %805 = vmatprep.subr.bf16.mxu0 0
    %806 = vmatpush1.bf16.msra.mxu0 0
    %807 = vmatprep.subr.bf16.mxu0 0
    %808 = vmatpush1.bf16.msra.mxu0 0
    %809 = vmatprep.subr.bf16.mxu0 0
    %810 = vmatpush1.bf16.msra.mxu0 0
    %811 = vmatprep.mubr.bf16.mxu0 0
    %812 = vmatmul.mubr.bf16.gmra.mrb[0].mxu0 %v777
    %v813 = vpop.f32.mrb[0].mxu0
    %v814 = vadd.f32 0.0, %v813
    %v815 = vpop.f32.mrb[0].mxu0
    %v816 = vadd.f32 0.0, %v815
    %v817 = vpop.f32.mrb[0].mxu0
    %v818 = vpop.f32.mrb[0].mxu0
    %819 = vdwg.mxu0
    %v821 = vsel %vm271, %v774, 0
    %823 = vmatprep.subr.bf16.mxu0 %v447
    %824 = vmatpush1.bf16.msra.mxu0 %v446
    %825 = vmatprep.subr.bf16.mxu0 %v449
    %826 = vmatpush1.bf16.msra.mxu0 %v448
    %827 = vmatprep.subr.bf16.mxu0 %v451
    %828 = vmatpush1.bf16.msra.mxu0 %v450
    %829 = vmatprep.subr.bf16.mxu0 %v453
    %830 = vmatpush1.bf16.msra.mxu0 %v452
    %831 = vmatprep.subr.bf16.mxu0 0
    %832 = vmatpush1.bf16.msra.mxu0 0
    %833 = vmatprep.subr.bf16.mxu0 0
    %834 = vmatpush1.bf16.msra.mxu0 0
    %835 = vmatprep.subr.bf16.mxu0 0
    %836 = vmatpush1.bf16.msra.mxu0 0
    %837 = vmatprep.subr.bf16.mxu0 0
    %838 = vmatpush1.bf16.msra.mxu0 0
    %839 = vmatprep.subr.bf16.mxu0 0
    %840 = vmatpush1.bf16.msra.mxu0 0
    %841 = vmatprep.subr.bf16.mxu0 0
    %842 = vmatpush1.bf16.msra.mxu0 0
    %843 = vmatprep.subr.bf16.mxu0 0
    %844 = vmatpush1.bf16.msra.mxu0 0
    %845 = vmatprep.subr.bf16.mxu0 0
    %846 = vmatpush1.bf16.msra.mxu0 0
    %847 = vmatprep.subr.bf16.mxu0 0
    %848 = vmatpush1.bf16.msra.mxu0 0
    %849 = vmatprep.subr.bf16.mxu0 0
    %850 = vmatpush1.bf16.msra.mxu0 0
    %851 = vmatprep.subr.bf16.mxu0 0
    %852 = vmatpush1.bf16.msra.mxu0 0
    %853 = vmatprep.subr.bf16.mxu0 0
    %854 = vmatpush1.bf16.msra.mxu0 0
    %855 = vmatprep.mubr.bf16.mxu0 0
    %856 = vmatmul.mubr.bf16.gmra.mrb[0].mxu0 %v821
    %v857 = vpop.f32.mrb[0].mxu0
    %v858 = vadd.f32 %v814, %v857
    %v859 = vpop.f32.mrb[0].mxu0
    %v860 = vadd.f32 %v816, %v859
    %v861 = vpop.f32.mrb[0].mxu0
    %v862 = vpop.f32.mrb[0].mxu0
    %863 = vdwg.mxu0
    %v864 = vadd.f32 %v858, %v224
    %v865 = vadd.f32 %v860, %v228
    %v866 = vxor.u32 %v864, 2147483648
    %v867 = vmul.f32 %v866, 1.442695
    %v868 = vpow.pop %v867
    %v869 = vadd.f32 %v868, 1.0
    %v870 = vrcp.pop %v869
    %v871 = vmul.f32 1.0, %v870
    %v872 = vxor.u32 %v865, 2147483648
    %v873 = vmul.f32 %v872, 1.442695
    %v874 = vpow.pop %v873
    %v875 = vadd.f32 %v874, 1.0
    %v876 = vrcp.pop %v875
    %v877 = vmul.f32 1.0, %v876
    %v878 = vtanh.pop %v865
    %v879 = vmul.f32 %v871, %v706
    %v880 = vmul.f32 %v871, %v878
    %882 = vrot.lane.b32.xlu0 %v880, 64
    %v883 = vpop.permute.xlu0 %882
    %v885 = vadd.f32 %v879, %v883
    %v886 = vtanh.pop %v885
    %v887 = vmul.f32 %v877, %v886
    %888 = vmatprep.subr.bf16.mxu0 %v256
    %889 = vmatpush1.bf16.msra.mxu0 %v255
    %890 = vmatprep.subr.bf16.mxu0 %v258
    %891 = vmatpush1.bf16.msra.mxu0 %v257
    %892 = vmatprep.subr.bf16.mxu0 %v260
    %893 = vmatpush1.bf16.msra.mxu0 %v259
    %894 = vmatprep.subr.bf16.mxu0 %v262
    %895 = vmatpush1.bf16.msra.mxu0 %v261
    %896 = vmatprep.subr.bf16.mxu0 0
    %897 = vmatpush1.bf16.msra.mxu0 0
    %898 = vmatprep.subr.bf16.mxu0 0
    %899 = vmatpush1.bf16.msra.mxu0 0
    %900 = vmatprep.subr.bf16.mxu0 0
    %901 = vmatpush1.bf16.msra.mxu0 0
    %902 = vmatprep.subr.bf16.mxu0 0
    %903 = vmatpush1.bf16.msra.mxu0 0
    %904 = vmatprep.subr.bf16.mxu0 0
    %905 = vmatpush1.bf16.msra.mxu0 0
    %906 = vmatprep.subr.bf16.mxu0 0
    %907 = vmatpush1.bf16.msra.mxu0 0
    %908 = vmatprep.subr.bf16.mxu0 0
    %909 = vmatpush1.bf16.msra.mxu0 0
    %910 = vmatprep.subr.bf16.mxu0 0
    %911 = vmatpush1.bf16.msra.mxu0 0
    %912 = vmatprep.subr.bf16.mxu0 0
    %913 = vmatpush1.bf16.msra.mxu0 0
    %914 = vmatprep.subr.bf16.mxu0 0
    %915 = vmatpush1.bf16.msra.mxu0 0
    %916 = vmatprep.subr.bf16.mxu0 0
    %917 = vmatpush1.bf16.msra.mxu0 0
    %918 = vmatprep.subr.bf16.mxu0 0
    %919 = vmatpush1.bf16.msra.mxu0 0
    %920 = vmatprep.mubr.bf16.mxu0 0
    %921 = vmatmul.mubr.bf16.gmra.mrb[0].mxu0 %v821
    %v922 = vpop.f32.mrb[0].mxu0
    %v923 = vadd.f32 0.0, %v922
    %v924 = vpop.f32.mrb[0].mxu0
    %v925 = vadd.f32 0.0, %v924
    %v926 = vpop.f32.mrb[0].mxu0
    %v927 = vpop.f32.mrb[0].mxu0
    %928 = vdwg.mxu0
    %v929 = vadd.f32 %v171, %v923
    %v930 = vadd.f32 %v173, %v925
    %v931 = vxor.u32 %v929, 2147483648
    %v932 = vmul.f32 %v931, 1.442695
    %v933 = vpow.pop %v932
    %v934 = vadd.f32 %v933, 1.0
    %v935 = vrcp.pop %v934
    %v936 = vmul.f32 1.0, %v935
    %v937 = vxor.u32 %v930, 2147483648
    %v938 = vmul.f32 %v937, 1.442695
    %v939 = vpow.pop %v938
    %v940 = vadd.f32 %v939, 1.0
    %v941 = vrcp.pop %v940
    %v942 = vmul.f32 1.0, %v941
    %v943 = vtanh.pop %v930
    %v944 = vmul.f32 %v936, %v771
    %v945 = vmul.f32 %v936, %v943
    %947 = vrot.lane.b32.xlu0 %v945, 64
    %v948 = vpop.permute.xlu0 %947
    %v950 = vadd.f32 %v944, %v948
    %v951 = vtanh.pop %v950
    %v952 = vmul.f32 %v942, %v951
    %v953 = vpack.c.bf16 %v952, %v952
    %v954 = vpack.c.bf16 %v887, %v887
    %v956 = vsel %vm271, %v954, 0
    %958 = vmatprep.subr.bf16.mxu0 %v366
    %959 = vmatpush1.bf16.msra.mxu0 %v365
    %960 = vmatprep.subr.bf16.mxu0 %v368
    %961 = vmatpush1.bf16.msra.mxu0 %v367
    %962 = vmatprep.subr.bf16.mxu0 %v370
    %963 = vmatpush1.bf16.msra.mxu0 %v369
    %964 = vmatprep.subr.bf16.mxu0 %v372
    %965 = vmatpush1.bf16.msra.mxu0 %v371
    %966 = vmatprep.subr.bf16.mxu0 0
    %967 = vmatpush1.bf16.msra.mxu0 0
    %968 = vmatprep.subr.bf16.mxu0 0
    %969 = vmatpush1.bf16.msra.mxu0 0
    %970 = vmatprep.subr.bf16.mxu0 0
    %971 = vmatpush1.bf16.msra.mxu0 0
    %972 = vmatprep.subr.bf16.mxu0 0
    %973 = vmatpush1.bf16.msra.mxu0 0
    %974 = vmatprep.subr.bf16.mxu0 0
    %975 = vmatpush1.bf16.msra.mxu0 0
    %976 = vmatprep.subr.bf16.mxu0 0
    %977 = vmatpush1.bf16.msra.mxu0 0
    %978 = vmatprep.subr.bf16.mxu0 0
    %979 = vmatpush1.bf16.msra.mxu0 0
    %980 = vmatprep.subr.bf16.mxu0 0
    %981 = vmatpush1.bf16.msra.mxu0 0
    %982 = vmatprep.subr.bf16.mxu0 0
    %983 = vmatpush1.bf16.msra.mxu0 0
    %984 = vmatprep.subr.bf16.mxu0 0
    %985 = vmatpush1.bf16.msra.mxu0 0
    %986 = vmatprep.subr.bf16.mxu0 0
    %987 = vmatpush1.bf16.msra.mxu0 0
    %988 = vmatprep.subr.bf16.mxu0 0
    %989 = vmatpush1.bf16.msra.mxu0 0
    %990 = vmatprep.mubr.bf16.mxu0 0
    %991 = vmatmul.mubr.bf16.gmra.mrb[0].mxu0 %v956
    %v992 = vpop.f32.mrb[0].mxu0
    %v993 = vadd.f32 0.0, %v992
    %v994 = vpop.f32.mrb[0].mxu0
    %v995 = vadd.f32 0.0, %v994
    %v996 = vpop.f32.mrb[0].mxu0
    %v997 = vpop.f32.mrb[0].mxu0
    %998 = vdwg.mxu0
    %v1000 = vsel %vm271, %v953, 0
    %1002 = vmatprep.subr.bf16.mxu0 %v447
    %1003 = vmatpush1.bf16.msra.mxu0 %v446
    %1004 = vmatprep.subr.bf16.mxu0 %v449
    %1005 = vmatpush1.bf16.msra.mxu0 %v448
    %1006 = vmatprep.subr.bf16.mxu0 %v451
    %1007 = vmatpush1.bf16.msra.mxu0 %v450
    %1008 = vmatprep.subr.bf16.mxu0 %v453
    %1009 = vmatpush1.bf16.msra.mxu0 %v452
    %1010 = vmatprep.subr.bf16.mxu0 0
    %1011 = vmatpush1.bf16.msra.mxu0 0
    %1012 = vmatprep.subr.bf16.mxu0 0
    %1013 = vmatpush1.bf16.msra.mxu0 0
    %1014 = vmatprep.subr.bf16.mxu0 0
    %1015 = vmatpush1.bf16.msra.mxu0 0
    %1016 = vmatprep.subr.bf16.mxu0 0
    %1017 = vmatpush1.bf16.msra.mxu0 0
    %1018 = vmatprep.subr.bf16.mxu0 0
    %1019 = vmatpush1.bf16.msra.mxu0 0
    %1020 = vmatprep.subr.bf16.mxu0 0
    %1021 = vmatpush1.bf16.msra.mxu0 0
    %1022 = vmatprep.subr.bf16.mxu0 0
    %1023 = vmatpush1.bf16.msra.mxu0 0
    %1024 = vmatprep.subr.bf16.mxu0 0
    %1025 = vmatpush1.bf16.msra.mxu0 0
    %1026 = vmatprep.subr.bf16.mxu0 0
    %1027 = vmatpush1.bf16.msra.mxu0 0
    %1028 = vmatprep.subr.bf16.mxu0 0
    %1029 = vmatpush1.bf16.msra.mxu0 0
    %1030 = vmatprep.subr.bf16.mxu0 0
    %1031 = vmatpush1.bf16.msra.mxu0 0
    %1032 = vmatprep.subr.bf16.mxu0 0
    %1033 = vmatpush1.bf16.msra.mxu0 0
    %1034 = vmatprep.mubr.bf16.mxu0 0
    %1035 = vmatmul.mubr.bf16.gmra.mrb[0].mxu0 %v1000
    %v1036 = vpop.f32.mrb[0].mxu0
    %v1037 = vadd.f32 %v993, %v1036
    %v1038 = vpop.f32.mrb[0].mxu0
    %v1039 = vadd.f32 %v995, %v1038
    %v1040 = vpop.f32.mrb[0].mxu0
    %v1041 = vpop.f32.mrb[0].mxu0
    %1042 = vdwg.mxu0
    %v1043 = vadd.f32 %v1037, %v224
    %v1044 = vadd.f32 %v1039, %v228
    %v1045 = vxor.u32 %v1043, 2147483648
    %v1046 = vmul.f32 %v1045, 1.442695
    %v1047 = vpow.pop %v1046
    %v1048 = vadd.f32 %v1047, 1.0
    %v1049 = vrcp.pop %v1048
    %v1050 = vmul.f32 1.0, %v1049
    %v1051 = vxor.u32 %v1044, 2147483648
    %v1052 = vmul.f32 %v1051, 1.442695
    %v1053 = vpow.pop %v1052
    %v1054 = vadd.f32 %v1053, 1.0
    %v1055 = vrcp.pop %v1054
    %v1056 = vmul.f32 1.0, %v1055
    %v1057 = vtanh.pop %v1044
    %v1058 = vmul.f32 %v1050, %v885
    %v1059 = vmul.f32 %v1050, %v1057
    %1061 = vrot.lane.b32.xlu0 %v1059, 64
    %v1062 = vpop.permute.xlu0 %1061
    %v1064 = vadd.f32 %v1058, %v1062
    %v1065 = vtanh.pop %v1064
    %v1066 = vmul.f32 %v1056, %v1065
    %1067 = vmatprep.subr.bf16.mxu0 %v256
    %1068 = vmatpush1.bf16.msra.mxu0 %v255
    %1069 = vmatprep.subr.bf16.mxu0 %v258
    %1070 = vmatpush1.bf16.msra.mxu0 %v257
    %1071 = vmatprep.subr.bf16.mxu0 %v260
    %1072 = vmatpush1.bf16.msra.mxu0 %v259
    %1073 = vmatprep.subr.bf16.mxu0 %v262
    %1074 = vmatpush1.bf16.msra.mxu0 %v261
    %1075 = vmatprep.subr.bf16.mxu0 0
    %1076 = vmatpush1.bf16.msra.mxu0 0
    %1077 = vmatprep.subr.bf16.mxu0 0
    %1078 = vmatpush1.bf16.msra.mxu0 0
    %1079 = vmatprep.subr.bf16.mxu0 0
    %1080 = vmatpush1.bf16.msra.mxu0 0
    %1081 = vmatprep.subr.bf16.mxu0 0
    %1082 = vmatpush1.bf16.msra.mxu0 0
    %1083 = vmatprep.subr.bf16.mxu0 0
    %1084 = vmatpush1.bf16.msra.mxu0 0
    %1085 = vmatprep.subr.bf16.mxu0 0
    %1086 = vmatpush1.bf16.msra.mxu0 0
    %1087 = vmatprep.subr.bf16.mxu0 0
    %1088 = vmatpush1.bf16.msra.mxu0 0
    %1089 = vmatprep.subr.bf16.mxu0 0
    %1090 = vmatpush1.bf16.msra.mxu0 0
    %1091 = vmatprep.subr.bf16.mxu0 0
    %1092 = vmatpush1.bf16.msra.mxu0 0
    %1093 = vmatprep.subr.bf16.mxu0 0
    %1094 = vmatpush1.bf16.msra.mxu0 0
    %1095 = vmatprep.subr.bf16.mxu0 0
    %1096 = vmatpush1.bf16.msra.mxu0 0
    %1097 = vmatprep.subr.bf16.mxu0 0
    %1098 = vmatpush1.bf16.msra.mxu0 0
    %1099 = vmatprep.mubr.bf16.mxu0 0
    %1100 = vmatmul.mubr.bf16.gmra.mrb[0].mxu0 %v1000
    %v1101 = vpop.f32.mrb[0].mxu0
    %v1102 = vadd.f32 0.0, %v1101
    %v1103 = vpop.f32.mrb[0].mxu0
    %v1104 = vadd.f32 0.0, %v1103
    %v1105 = vpop.f32.mrb[0].mxu0
    %v1106 = vpop.f32.mrb[0].mxu0
    %1107 = vdwg.mxu0
    %v1108 = vadd.f32 %v177, %v1102
    %v1109 = vadd.f32 %v179, %v1104
    %v1110 = vxor.u32 %v1108, 2147483648
    %v1111 = vmul.f32 %v1110, 1.442695
    %v1112 = vpow.pop %v1111
    %v1113 = vadd.f32 %v1112, 1.0
    %v1114 = vrcp.pop %v1113
    %v1115 = vmul.f32 1.0, %v1114
    %v1116 = vxor.u32 %v1109, 2147483648
    %v1117 = vmul.f32 %v1116, 1.442695
    %v1118 = vpow.pop %v1117
    %v1119 = vadd.f32 %v1118, 1.0
    %v1120 = vrcp.pop %v1119
    %v1121 = vmul.f32 1.0, %v1120
    %v1122 = vtanh.pop %v1109
    %v1123 = vmul.f32 %v1115, %v950
    %v1124 = vmul.f32 %v1115, %v1122
    %1126 = vrot.lane.b32.xlu0 %v1124, 64
    %v1127 = vpop.permute.xlu0 %1126
    %v1129 = vadd.f32 %v1123, %v1127
    %v1130 = vtanh.pop %v1129
    %v1131 = vmul.f32 %v1121, %v1130
    %v1132 = vpack.c.bf16 %v1131, %v1131
    %v1133 = vpack.c.bf16 %v1066, %v1066
    %v1135 = vsel %vm271, %v1133, 0
    %1137 = vmatprep.subr.bf16.mxu0 %v366
    %1138 = vmatpush1.bf16.msra.mxu0 %v365
    %1139 = vmatprep.subr.bf16.mxu0 %v368
    %1140 = vmatpush1.bf16.msra.mxu0 %v367
    %1141 = vmatprep.subr.bf16.mxu0 %v370
    %1142 = vmatpush1.bf16.msra.mxu0 %v369
    %1143 = vmatprep.subr.bf16.mxu0 %v372
    %1144 = vmatpush1.bf16.msra.mxu0 %v371
    %1145 = vmatprep.subr.bf16.mxu0 0
    %1146 = vmatpush1.bf16.msra.mxu0 0
    %1147 = vmatprep.subr.bf16.mxu0 0
    %1148 = vmatpush1.bf16.msra.mxu0 0
    %1149 = vmatprep.subr.bf16.mxu0 0
    %1150 = vmatpush1.bf16.msra.mxu0 0
    %1151 = vmatprep.subr.bf16.mxu0 0
    %1152 = vmatpush1.bf16.msra.mxu0 0
    %1153 = vmatprep.subr.bf16.mxu0 0
    %1154 = vmatpush1.bf16.msra.mxu0 0
    %1155 = vmatprep.subr.bf16.mxu0 0
    %1156 = vmatpush1.bf16.msra.mxu0 0
    %1157 = vmatprep.subr.bf16.mxu0 0
    %1158 = vmatpush1.bf16.msra.mxu0 0
    %1159 = vmatprep.subr.bf16.mxu0 0
    %1160 = vmatpush1.bf16.msra.mxu0 0
    %1161 = vmatprep.subr.bf16.mxu0 0
    %1162 = vmatpush1.bf16.msra.mxu0 0
    %1163 = vmatprep.subr.bf16.mxu0 0
    %1164 = vmatpush1.bf16.msra.mxu0 0
    %1165 = vmatprep.subr.bf16.mxu0 0
    %1166 = vmatpush1.bf16.msra.mxu0 0
    %1167 = vmatprep.subr.bf16.mxu0 0
    %1168 = vmatpush1.bf16.msra.mxu0 0
    %1169 = vmatprep.mubr.bf16.mxu0 0
    %1170 = vmatmul.mubr.bf16.gmra.mrb[0].mxu0 %v1135
    %v1171 = vpop.f32.mrb[0].mxu0
    %v1172 = vadd.f32 0.0, %v1171
    %v1173 = vpop.f32.mrb[0].mxu0
    %v1174 = vadd.f32 0.0, %v1173
    %v1175 = vpop.f32.mrb[0].mxu0
    %v1176 = vpop.f32.mrb[0].mxu0
    %1177 = vdwg.mxu0
    %v1179 = vsel %vm271, %v1132, 0
    %1181 = vmatprep.subr.bf16.mxu0 %v447
    %1182 = vmatpush1.bf16.msra.mxu0 %v446
    %1183 = vmatprep.subr.bf16.mxu0 %v449
    %1184 = vmatpush1.bf16.msra.mxu0 %v448
    %1185 = vmatprep.subr.bf16.mxu0 %v451
    %1186 = vmatpush1.bf16.msra.mxu0 %v450
    %1187 = vmatprep.subr.bf16.mxu0 %v453
    %1188 = vmatpush1.bf16.msra.mxu0 %v452
    %1189 = vmatprep.subr.bf16.mxu0 0
    %1190 = vmatpush1.bf16.msra.mxu0 0
    %1191 = vmatprep.subr.bf16.mxu0 0
    %1192 = vmatpush1.bf16.msra.mxu0 0
    %1193 = vmatprep.subr.bf16.mxu0 0
    %1194 = vmatpush1.bf16.msra.mxu0 0
    %1195 = vmatprep.subr.bf16.mxu0 0
    %1196 = vmatpush1.bf16.msra.mxu0 0
    %1197 = vmatprep.subr.bf16.mxu0 0
    %1198 = vmatpush1.bf16.msra.mxu0 0
    %1199 = vmatprep.subr.bf16.mxu0 0
    %1200 = vmatpush1.bf16.msra.mxu0 0
    %1201 = vmatprep.subr.bf16.mxu0 0
    %1202 = vmatpush1.bf16.msra.mxu0 0
    %1203 = vmatprep.subr.bf16.mxu0 0
    %1204 = vmatpush1.bf16.msra.mxu0 0
    %1205 = vmatprep.subr.bf16.mxu0 0
    %1206 = vmatpush1.bf16.msra.mxu0 0
    %1207 = vmatprep.subr.bf16.mxu0 0
    %1208 = vmatpush1.bf16.msra.mxu0 0
    %1209 = vmatprep.subr.bf16.mxu0 0
    %1210 = vmatpush1.bf16.msra.mxu0 0
    %1211 = vmatprep.subr.bf16.mxu0 0
    %1212 = vmatpush1.bf16.msra.mxu0 0
    %1213 = vmatprep.mubr.bf16.mxu0 0
    %1214 = vmatmul.mubr.bf16.gmra.mrb[0].mxu0 %v1179
    %v1215 = vpop.f32.mrb[0].mxu0
    %v1216 = vadd.f32 %v1172, %v1215
    %v1217 = vpop.f32.mrb[0].mxu0
    %v1218 = vadd.f32 %v1174, %v1217
    %v1219 = vpop.f32.mrb[0].mxu0
    %v1220 = vpop.f32.mrb[0].mxu0
    %1221 = vdwg.mxu0
    %v1222 = vadd.f32 %v1216, %v224
    %v1223 = vadd.f32 %v1218, %v228
    %v1224 = vxor.u32 %v1222, 2147483648
    %v1225 = vmul.f32 %v1224, 1.442695
    %v1226 = vpow.pop %v1225
    %v1227 = vadd.f32 %v1226, 1.0
    %v1228 = vrcp.pop %v1227
    %v1229 = vmul.f32 1.0, %v1228
    %v1230 = vxor.u32 %v1223, 2147483648
    %v1231 = vmul.f32 %v1230, 1.442695
    %v1232 = vpow.pop %v1231
    %v1233 = vadd.f32 %v1232, 1.0
    %v1234 = vrcp.pop %v1233
    %v1235 = vmul.f32 1.0, %v1234
    %v1236 = vtanh.pop %v1223
    %v1237 = vmul.f32 %v1229, %v1064
    %v1238 = vmul.f32 %v1229, %v1236
    %1240 = vrot.lane.b32.xlu0 %v1238, 64
    %v1241 = vpop.permute.xlu0 %1240
    %v1243 = vadd.f32 %v1237, %v1241
    %v1244 = vtanh.pop %v1243
    %v1245 = vmul.f32 %v1235, %v1244
    %1246 = vmatprep.subr.bf16.mxu0 %v256
    %1247 = vmatpush1.bf16.msra.mxu0 %v255
    %1248 = vmatprep.subr.bf16.mxu0 %v258
    %1249 = vmatpush1.bf16.msra.mxu0 %v257
    %1250 = vmatprep.subr.bf16.mxu0 %v260
    %1251 = vmatpush1.bf16.msra.mxu0 %v259
    %1252 = vmatprep.subr.bf16.mxu0 %v262
    %1253 = vmatpush1.bf16.msra.mxu0 %v261
    %1254 = vmatprep.subr.bf16.mxu0 0
    %1255 = vmatpush1.bf16.msra.mxu0 0
    %1256 = vmatprep.subr.bf16.mxu0 0
    %1257 = vmatpush1.bf16.msra.mxu0 0
    %1258 = vmatprep.subr.bf16.mxu0 0
    %1259 = vmatpush1.bf16.msra.mxu0 0
    %1260 = vmatprep.subr.bf16.mxu0 0
    %1261 = vmatpush1.bf16.msra.mxu0 0
    %1262 = vmatprep.subr.bf16.mxu0 0
    %1263 = vmatpush1.bf16.msra.mxu0 0
    %1264 = vmatprep.subr.bf16.mxu0 0
    %1265 = vmatpush1.bf16.msra.mxu0 0
    %1266 = vmatprep.subr.bf16.mxu0 0
    %1267 = vmatpush1.bf16.msra.mxu0 0
    %1268 = vmatprep.subr.bf16.mxu0 0
    %1269 = vmatpush1.bf16.msra.mxu0 0
    %1270 = vmatprep.subr.bf16.mxu0 0
    %1271 = vmatpush1.bf16.msra.mxu0 0
    %1272 = vmatprep.subr.bf16.mxu0 0
    %1273 = vmatpush1.bf16.msra.mxu0 0
    %1274 = vmatprep.subr.bf16.mxu0 0
    %1275 = vmatpush1.bf16.msra.mxu0 0
    %1276 = vmatprep.subr.bf16.mxu0 0
    %1277 = vmatpush1.bf16.msra.mxu0 0
    %1278 = vmatprep.mubr.bf16.mxu0 0
    %1279 = vmatmul.mubr.bf16.gmra.mrb[0].mxu0 %v1179
    %v1280 = vpop.f32.mrb[0].mxu0
    %v1281 = vadd.f32 0.0, %v1280
    %v1282 = vpop.f32.mrb[0].mxu0
    %v1283 = vadd.f32 0.0, %v1282
    %v1284 = vpop.f32.mrb[0].mxu0
    %v1285 = vpop.f32.mrb[0].mxu0
    %1286 = vdwg.mxu0
    %v1287 = vadd.f32 %v181, %v1281
    %v1288 = vadd.f32 %v183, %v1283
    %v1289 = vxor.u32 %v1287, 2147483648
    %v1290 = vmul.f32 %v1289, 1.442695
    %v1291 = vpow.pop %v1290
    %v1292 = vadd.f32 %v1291, 1.0
    %v1293 = vrcp.pop %v1292
    %v1294 = vmul.f32 1.0, %v1293
    %v1295 = vxor.u32 %v1288, 2147483648
    %v1296 = vmul.f32 %v1295, 1.442695
    %v1297 = vpow.pop %v1296
    %v1298 = vadd.f32 %v1297, 1.0
    %v1299 = vrcp.pop %v1298
    %v1300 = vmul.f32 1.0, %v1299
    %v1301 = vtanh.pop %v1288
    %v1302 = vmul.f32 %v1294, %v1129
    %v1303 = vmul.f32 %v1294, %v1301
    %1305 = vrot.lane.b32.xlu0 %v1303, 64
    %v1306 = vpop.permute.xlu0 %1305
    %v1308 = vadd.f32 %v1302, %v1306
    %v1309 = vtanh.pop %v1308
    %v1310 = vmul.f32 %v1300, %v1309
    %v1311 = vpack.c.bf16 %v1310, %v1310
    %v1312 = vpack.c.bf16 %v1245, %v1245
    %v1314 = vsel %vm271, %v1312, 0
    %1316 = vmatprep.subr.bf16.mxu0 %v366
    %1317 = vmatpush1.bf16.msra.mxu0 %v365
    %1318 = vmatprep.subr.bf16.mxu0 %v368
    %1319 = vmatpush1.bf16.msra.mxu0 %v367
    %1320 = vmatprep.subr.bf16.mxu0 %v370
    %1321 = vmatpush1.bf16.msra.mxu0 %v369
    %1322 = vmatprep.subr.bf16.mxu0 %v372
    %1323 = vmatpush1.bf16.msra.mxu0 %v371
    %1324 = vmatprep.subr.bf16.mxu0 0
    %1325 = vmatpush1.bf16.msra.mxu0 0
    %1326 = vmatprep.subr.bf16.mxu0 0
    %1327 = vmatpush1.bf16.msra.mxu0 0
    %1328 = vmatprep.subr.bf16.mxu0 0
    %1329 = vmatpush1.bf16.msra.mxu0 0
    %1330 = vmatprep.subr.bf16.mxu0 0
    %1331 = vmatpush1.bf16.msra.mxu0 0
    %1332 = vmatprep.subr.bf16.mxu0 0
    %1333 = vmatpush1.bf16.msra.mxu0 0
    %1334 = vmatprep.subr.bf16.mxu0 0
    %1335 = vmatpush1.bf16.msra.mxu0 0
    %1336 = vmatprep.subr.bf16.mxu0 0
    %1337 = vmatpush1.bf16.msra.mxu0 0
    %1338 = vmatprep.subr.bf16.mxu0 0
    %1339 = vmatpush1.bf16.msra.mxu0 0
    %1340 = vmatprep.subr.bf16.mxu0 0
    %1341 = vmatpush1.bf16.msra.mxu0 0
    %1342 = vmatprep.subr.bf16.mxu0 0
    %1343 = vmatpush1.bf16.msra.mxu0 0
    %1344 = vmatprep.subr.bf16.mxu0 0
    %1345 = vmatpush1.bf16.msra.mxu0 0
    %1346 = vmatprep.subr.bf16.mxu0 0
    %1347 = vmatpush1.bf16.msra.mxu0 0
    %1348 = vmatprep.mubr.bf16.mxu0 0
    %1349 = vmatmul.mubr.bf16.gmra.mrb[0].mxu0 %v1314
    %v1350 = vpop.f32.mrb[0].mxu0
    %v1351 = vadd.f32 0.0, %v1350
    %v1352 = vpop.f32.mrb[0].mxu0
    %v1353 = vadd.f32 0.0, %v1352
    %v1354 = vpop.f32.mrb[0].mxu0
    %v1355 = vpop.f32.mrb[0].mxu0
    %1356 = vdwg.mxu0
    %v1358 = vsel %vm271, %v1311, 0
    %1360 = vmatprep.subr.bf16.mxu0 %v447
    %1361 = vmatpush1.bf16.msra.mxu0 %v446
    %1362 = vmatprep.subr.bf16.mxu0 %v449
    %1363 = vmatpush1.bf16.msra.mxu0 %v448
    %1364 = vmatprep.subr.bf16.mxu0 %v451
    %1365 = vmatpush1.bf16.msra.mxu0 %v450
    %1366 = vmatprep.subr.bf16.mxu0 %v453
    %1367 = vmatpush1.bf16.msra.mxu0 %v452
    %1368 = vmatprep.subr.bf16.mxu0 0
    %1369 = vmatpush1.bf16.msra.mxu0 0
    %1370 = vmatprep.subr.bf16.mxu0 0
    %1371 = vmatpush1.bf16.msra.mxu0 0
    %1372 = vmatprep.subr.bf16.mxu0 0
    %1373 = vmatpush1.bf16.msra.mxu0 0
    %1374 = vmatprep.subr.bf16.mxu0 0
    %1375 = vmatpush1.bf16.msra.mxu0 0
    %1376 = vmatprep.subr.bf16.mxu0 0
    %1377 = vmatpush1.bf16.msra.mxu0 0
    %1378 = vmatprep.subr.bf16.mxu0 0
    %1379 = vmatpush1.bf16.msra.mxu0 0
    %1380 = vmatprep.subr.bf16.mxu0 0
    %1381 = vmatpush1.bf16.msra.mxu0 0
    %1382 = vmatprep.subr.bf16.mxu0 0
    %1383 = vmatpush1.bf16.msra.mxu0 0
    %1384 = vmatprep.subr.bf16.mxu0 0
    %1385 = vmatpush1.bf16.msra.mxu0 0
    %1386 = vmatprep.subr.bf16.mxu0 0
    %1387 = vmatpush1.bf16.msra.mxu0 0
    %1388 = vmatprep.subr.bf16.mxu0 0
    %1389 = vmatpush1.bf16.msra.mxu0 0
    %1390 = vmatprep.subr.bf16.mxu0 0
    %1391 = vmatpush1.bf16.msra.mxu0 0
    %1392 = vmatprep.mubr.bf16.mxu0 0
    %1393 = vmatmul.mubr.bf16.gmra.mrb[0].mxu0 %v1358
    %v1394 = vpop.f32.mrb[0].mxu0
    %v1395 = vadd.f32 %v1351, %v1394
    %v1396 = vpop.f32.mrb[0].mxu0
    %v1397 = vadd.f32 %v1353, %v1396
    %v1398 = vpop.f32.mrb[0].mxu0
    %v1399 = vpop.f32.mrb[0].mxu0
    %1400 = vdwg.mxu0
    %v1401 = vadd.f32 %v1395, %v224
    %v1402 = vadd.f32 %v1397, %v228
    %v1403 = vxor.u32 %v1401, 2147483648
    %v1404 = vmul.f32 %v1403, 1.442695
    %v1405 = vpow.pop %v1404
    %v1406 = vadd.f32 %v1405, 1.0
    %v1407 = vrcp.pop %v1406
    %v1408 = vmul.f32 1.0, %v1407
    %v1409 = vxor.u32 %v1402, 2147483648
    %v1410 = vmul.f32 %v1409, 1.442695
    %v1411 = vpow.pop %v1410
    %v1412 = vadd.f32 %v1411, 1.0
    %v1413 = vrcp.pop %v1412
    %v1414 = vmul.f32 1.0, %v1413
    %v1415 = vtanh.pop %v1402
    %v1416 = vmul.f32 %v1408, %v1243
    %v1417 = vmul.f32 %v1408, %v1415
    %1419 = vrot.lane.b32.xlu0 %v1417, 64
    %v1420 = vpop.permute.xlu0 %1419
    %v1422 = vadd.f32 %v1416, %v1420
    %v1423 = vtanh.pop %v1422
    %v1424 = vmul.f32 %v1414, %v1423
    %1425 = vmatprep.subr.bf16.mxu0 %v256
    %1426 = vmatpush1.bf16.msra.mxu0 %v255
    %1427 = vmatprep.subr.bf16.mxu0 %v258
    %1428 = vmatpush1.bf16.msra.mxu0 %v257
    %1429 = vmatprep.subr.bf16.mxu0 %v260
    %1430 = vmatpush1.bf16.msra.mxu0 %v259
    %1431 = vmatprep.subr.bf16.mxu0 %v262
    %1432 = vmatpush1.bf16.msra.mxu0 %v261
    %1433 = vmatprep.subr.bf16.mxu0 0
    %1434 = vmatpush1.bf16.msra.mxu0 0
    %1435 = vmatprep.subr.bf16.mxu0 0
    %1436 = vmatpush1.bf16.msra.mxu0 0
    %1437 = vmatprep.subr.bf16.mxu0 0
    %1438 = vmatpush1.bf16.msra.mxu0 0
    %1439 = vmatprep.subr.bf16.mxu0 0
    %1440 = vmatpush1.bf16.msra.mxu0 0
    %1441 = vmatprep.subr.bf16.mxu0 0
    %1442 = vmatpush1.bf16.msra.mxu0 0
    %1443 = vmatprep.subr.bf16.mxu0 0
    %1444 = vmatpush1.bf16.msra.mxu0 0
    %1445 = vmatprep.subr.bf16.mxu0 0
    %1446 = vmatpush1.bf16.msra.mxu0 0
    %1447 = vmatprep.subr.bf16.mxu0 0
    %1448 = vmatpush1.bf16.msra.mxu0 0
    %1449 = vmatprep.subr.bf16.mxu0 0
    %1450 = vmatpush1.bf16.msra.mxu0 0
    %1451 = vmatprep.subr.bf16.mxu0 0
    %1452 = vmatpush1.bf16.msra.mxu0 0
    %1453 = vmatprep.subr.bf16.mxu0 0
    %1454 = vmatpush1.bf16.msra.mxu0 0
    %1455 = vmatprep.subr.bf16.mxu0 0
    %1456 = vmatpush1.bf16.msra.mxu0 0
    %1457 = vmatprep.mubr.bf16.mxu0 0
    %1458 = vmatmul.mubr.bf16.gmra.mrb[0].mxu0 %v1358
    %v1459 = vpop.f32.mrb[0].mxu0
    %v1460 = vadd.f32 0.0, %v1459
    %v1461 = vpop.f32.mrb[0].mxu0
    %v1462 = vadd.f32 0.0, %v1461
    %v1463 = vpop.f32.mrb[0].mxu0
    %v1464 = vpop.f32.mrb[0].mxu0
    %1465 = vdwg.mxu0
    %v1466 = vadd.f32 %v187, %v1460
    %v1467 = vadd.f32 %v189, %v1462
    %v1468 = vxor.u32 %v1466, 2147483648
    %v1469 = vmul.f32 %v1468, 1.442695
    %v1470 = vpow.pop %v1469
    %v1471 = vadd.f32 %v1470, 1.0
    %v1472 = vrcp.pop %v1471
    %v1473 = vmul.f32 1.0, %v1472
    %v1474 = vxor.u32 %v1467, 2147483648
    %v1475 = vmul.f32 %v1474, 1.442695
    %v1476 = vpow.pop %v1475
    %v1477 = vadd.f32 %v1476, 1.0
    %v1478 = vrcp.pop %v1477
    %v1479 = vmul.f32 1.0, %v1478
    %v1480 = vtanh.pop %v1467
    %v1481 = vmul.f32 %v1473, %v1308
    %v1482 = vmul.f32 %v1473, %v1480
    %1484 = vrot.lane.b32.xlu0 %v1482, 64
    %v1485 = vpop.permute.xlu0 %1484
    %v1487 = vadd.f32 %v1481, %v1485
    %v1488 = vtanh.pop %v1487
    %v1489 = vmul.f32 %v1479, %v1488
    %v1490 = vpack.c.bf16 %v1489, %v1489
    %v1491 = vpack.c.bf16 %v1424, %v1424
    %v1493 = vsel %vm271, %v1491, 0
    %1495 = vmatprep.subr.bf16.mxu0 %v366
    %1496 = vmatpush1.bf16.msra.mxu0 %v365
    %1497 = vmatprep.subr.bf16.mxu0 %v368
    %1498 = vmatpush1.bf16.msra.mxu0 %v367
    %1499 = vmatprep.subr.bf16.mxu0 %v370
    %1500 = vmatpush1.bf16.msra.mxu0 %v369
    %1501 = vmatprep.subr.bf16.mxu0 %v372
    %1502 = vmatpush1.bf16.msra.mxu0 %v371
    %1503 = vmatprep.subr.bf16.mxu0 0
    %1504 = vmatpush1.bf16.msra.mxu0 0
    %1505 = vmatprep.subr.bf16.mxu0 0
    %1506 = vmatpush1.bf16.msra.mxu0 0
    %1507 = vmatprep.subr.bf16.mxu0 0
    %1508 = vmatpush1.bf16.msra.mxu0 0
    %1509 = vmatprep.subr.bf16.mxu0 0
    %1510 = vmatpush1.bf16.msra.mxu0 0
    %1511 = vmatprep.subr.bf16.mxu0 0
    %1512 = vmatpush1.bf16.msra.mxu0 0
    %1513 = vmatprep.subr.bf16.mxu0 0
    %1514 = vmatpush1.bf16.msra.mxu0 0
    %1515 = vmatprep.subr.bf16.mxu0 0
    %1516 = vmatpush1.bf16.msra.mxu0 0
    %1517 = vmatprep.subr.bf16.mxu0 0
    %1518 = vmatpush1.bf16.msra.mxu0 0
    %1519 = vmatprep.subr.bf16.mxu0 0
    %1520 = vmatpush1.bf16.msra.mxu0 0
    %1521 = vmatprep.subr.bf16.mxu0 0
    %1522 = vmatpush1.bf16.msra.mxu0 0
    %1523 = vmatprep.subr.bf16.mxu0 0
    %1524 = vmatpush1.bf16.msra.mxu0 0
    %1525 = vmatprep.subr.bf16.mxu0 0
    %1526 = vmatpush1.bf16.msra.mxu0 0
    %1527 = vmatprep.mubr.bf16.mxu0 0
    %1528 = vmatmul.mubr.bf16.gmra.mrb[0].mxu0 %v1493
    %v1529 = vpop.f32.mrb[0].mxu0
    %v1530 = vadd.f32 0.0, %v1529
    %v1531 = vpop.f32.mrb[0].mxu0
    %v1532 = vadd.f32 0.0, %v1531
    %v1533 = vpop.f32.mrb[0].mxu0
    %v1534 = vpop.f32.mrb[0].mxu0
    %1535 = vdwg.mxu0
    %v1537 = vsel %vm271, %v1490, 0
    %1539 = vmatprep.subr.bf16.mxu0 %v447
    %1540 = vmatpush1.bf16.msra.mxu0 %v446
    %1541 = vmatprep.subr.bf16.mxu0 %v449
    %1542 = vmatpush1.bf16.msra.mxu0 %v448
    %1543 = vmatprep.subr.bf16.mxu0 %v451
    %1544 = vmatpush1.bf16.msra.mxu0 %v450
    %1545 = vmatprep.subr.bf16.mxu0 %v453
    %1546 = vmatpush1.bf16.msra.mxu0 %v452
    %1547 = vmatprep.subr.bf16.mxu0 0
    %1548 = vmatpush1.bf16.msra.mxu0 0
    %1549 = vmatprep.subr.bf16.mxu0 0
    %1550 = vmatpush1.bf16.msra.mxu0 0
    %1551 = vmatprep.subr.bf16.mxu0 0
    %1552 = vmatpush1.bf16.msra.mxu0 0
    %1553 = vmatprep.subr.bf16.mxu0 0
    %1554 = vmatpush1.bf16.msra.mxu0 0
    %1555 = vmatprep.subr.bf16.mxu0 0
    %1556 = vmatpush1.bf16.msra.mxu0 0
    %1557 = vmatprep.subr.bf16.mxu0 0
    %1558 = vmatpush1.bf16.msra.mxu0 0
    %1559 = vmatprep.subr.bf16.mxu0 0
    %1560 = vmatpush1.bf16.msra.mxu0 0
    %1561 = vmatprep.subr.bf16.mxu0 0
    %1562 = vmatpush1.bf16.msra.mxu0 0
    %1563 = vmatprep.subr.bf16.mxu0 0
    %1564 = vmatpush1.bf16.msra.mxu0 0
    %1565 = vmatprep.subr.bf16.mxu0 0
    %1566 = vmatpush1.bf16.msra.mxu0 0
    %1567 = vmatprep.subr.bf16.mxu0 0
    %1568 = vmatpush1.bf16.msra.mxu0 0
    %1569 = vmatprep.subr.bf16.mxu0 0
    %1570 = vmatpush1.bf16.msra.mxu0 0
    %1571 = vmatprep.mubr.bf16.mxu0 0
    %1572 = vmatmul.mubr.bf16.gmra.mrb[0].mxu0 %v1537
    %v1573 = vpop.f32.mrb[0].mxu0
    %v1574 = vadd.f32 %v1530, %v1573
    %v1575 = vpop.f32.mrb[0].mxu0
    %v1576 = vadd.f32 %v1532, %v1575
    %v1577 = vpop.f32.mrb[0].mxu0
    %v1578 = vpop.f32.mrb[0].mxu0
    %1579 = vdwg.mxu0
    %v1580 = vadd.f32 %v1574, %v224
    %v1581 = vadd.f32 %v1576, %v228
    %v1582 = vxor.u32 %v1580, 2147483648
    %v1583 = vmul.f32 %v1582, 1.442695
    %v1584 = vpow.pop %v1583
    %v1585 = vadd.f32 %v1584, 1.0
    %v1586 = vrcp.pop %v1585
    %v1587 = vmul.f32 1.0, %v1586
    %v1588 = vxor.u32 %v1581, 2147483648
    %v1589 = vmul.f32 %v1588, 1.442695
    %v1590 = vpow.pop %v1589
    %v1591 = vadd.f32 %v1590, 1.0
    %v1592 = vrcp.pop %v1591
    %v1593 = vmul.f32 1.0, %v1592
    %v1594 = vtanh.pop %v1581
    %v1595 = vmul.f32 %v1587, %v1422
    %v1596 = vmul.f32 %v1587, %v1594
    %1598 = vrot.lane.b32.xlu0 %v1596, 64
    %v1599 = vpop.permute.xlu0 %1598
    %v1601 = vadd.f32 %v1595, %v1599
    %v1602 = vtanh.pop %v1601
    %v1603 = vmul.f32 %v1593, %v1602
    %1604 = vmatprep.subr.bf16.mxu0 %v256
    %1605 = vmatpush1.bf16.msra.mxu0 %v255
    %1606 = vmatprep.subr.bf16.mxu0 %v258
    %1607 = vmatpush1.bf16.msra.mxu0 %v257
    %1608 = vmatprep.subr.bf16.mxu0 %v260
    %1609 = vmatpush1.bf16.msra.mxu0 %v259
    %1610 = vmatprep.subr.bf16.mxu0 %v262
    %1611 = vmatpush1.bf16.msra.mxu0 %v261
    %1612 = vmatprep.subr.bf16.mxu0 0
    %1613 = vmatpush1.bf16.msra.mxu0 0
    %1614 = vmatprep.subr.bf16.mxu0 0
    %1615 = vmatpush1.bf16.msra.mxu0 0
    %1616 = vmatprep.subr.bf16.mxu0 0
    %1617 = vmatpush1.bf16.msra.mxu0 0
    %1618 = vmatprep.subr.bf16.mxu0 0
    %1619 = vmatpush1.bf16.msra.mxu0 0
    %1620 = vmatprep.subr.bf16.mxu0 0
    %1621 = vmatpush1.bf16.msra.mxu0 0
    %1622 = vmatprep.subr.bf16.mxu0 0
    %1623 = vmatpush1.bf16.msra.mxu0 0
    %1624 = vmatprep.subr.bf16.mxu0 0
    %1625 = vmatpush1.bf16.msra.mxu0 0
    %1626 = vmatprep.subr.bf16.mxu0 0
    %1627 = vmatpush1.bf16.msra.mxu0 0
    %1628 = vmatprep.subr.bf16.mxu0 0
    %1629 = vmatpush1.bf16.msra.mxu0 0
    %1630 = vmatprep.subr.bf16.mxu0 0
    %1631 = vmatpush1.bf16.msra.mxu0 0
    %1632 = vmatprep.subr.bf16.mxu0 0
    %1633 = vmatpush1.bf16.msra.mxu0 0
    %1634 = vmatprep.subr.bf16.mxu0 0
    %1635 = vmatpush1.bf16.msra.mxu0 0
    %1636 = vmatprep.mubr.bf16.mxu0 0
    %1637 = vmatmul.mubr.bf16.gmra.mrb[0].mxu0 %v1537
    %v1638 = vpop.f32.mrb[0].mxu0
    %v1639 = vadd.f32 0.0, %v1638
    %v1640 = vpop.f32.mrb[0].mxu0
    %v1641 = vadd.f32 0.0, %v1640
    %v1642 = vpop.f32.mrb[0].mxu0
    %v1643 = vpop.f32.mrb[0].mxu0
    %1644 = vdwg.mxu0
    %v1645 = vadd.f32 %v191, %v1639
    %v1646 = vadd.f32 %v193, %v1641
    %v1647 = vxor.u32 %v1645, 2147483648
    %v1648 = vmul.f32 %v1647, 1.442695
    %v1649 = vpow.pop %v1648
    %v1650 = vadd.f32 %v1649, 1.0
    %v1651 = vrcp.pop %v1650
    %v1652 = vmul.f32 1.0, %v1651
    %v1653 = vxor.u32 %v1646, 2147483648
    %v1654 = vmul.f32 %v1653, 1.442695
    %v1655 = vpow.pop %v1654
    %v1656 = vadd.f32 %v1655, 1.0
    %v1657 = vrcp.pop %v1656
    %v1658 = vmul.f32 1.0, %v1657
    %v1659 = vtanh.pop %v1646
    %v1660 = vmul.f32 %v1652, %v1487
    %v1661 = vmul.f32 %v1652, %v1659
    %1663 = vrot.lane.b32.xlu0 %v1661, 64
    %v1664 = vpop.permute.xlu0 %1663
    %v1666 = vadd.f32 %v1660, %v1664
    %v1667 = vtanh.pop %v1666
    %v1668 = vmul.f32 %v1658, %v1667
    %v1669 = vpack.c.bf16 %v1668, %v1668
    %v1670 = vpack.c.bf16 %v1603, %v1603
    %v1672 = vsel %vm271, %v1670, 0
    %1674 = vmatprep.subr.bf16.mxu0 %v366
    %1675 = vmatpush1.bf16.msra.mxu0 %v365
    %1676 = vmatprep.subr.bf16.mxu0 %v368
    %1677 = vmatpush1.bf16.msra.mxu0 %v367
    %1678 = vmatprep.subr.bf16.mxu0 %v370
    %1679 = vmatpush1.bf16.msra.mxu0 %v369
    %1680 = vmatprep.subr.bf16.mxu0 %v372
    %1681 = vmatpush1.bf16.msra.mxu0 %v371
    %1682 = vmatprep.subr.bf16.mxu0 0
    %1683 = vmatpush1.bf16.msra.mxu0 0
    %1684 = vmatprep.subr.bf16.mxu0 0
    %1685 = vmatpush1.bf16.msra.mxu0 0
    %1686 = vmatprep.subr.bf16.mxu0 0
    %1687 = vmatpush1.bf16.msra.mxu0 0
    %1688 = vmatprep.subr.bf16.mxu0 0
    %1689 = vmatpush1.bf16.msra.mxu0 0
    %1690 = vmatprep.subr.bf16.mxu0 0
    %1691 = vmatpush1.bf16.msra.mxu0 0
    %1692 = vmatprep.subr.bf16.mxu0 0
    %1693 = vmatpush1.bf16.msra.mxu0 0
    %1694 = vmatprep.subr.bf16.mxu0 0
    %1695 = vmatpush1.bf16.msra.mxu0 0
    %1696 = vmatprep.subr.bf16.mxu0 0
    %1697 = vmatpush1.bf16.msra.mxu0 0
    %1698 = vmatprep.subr.bf16.mxu0 0
    %1699 = vmatpush1.bf16.msra.mxu0 0
    %1700 = vmatprep.subr.bf16.mxu0 0
    %1701 = vmatpush1.bf16.msra.mxu0 0
    %1702 = vmatprep.subr.bf16.mxu0 0
    %1703 = vmatpush1.bf16.msra.mxu0 0
    %1704 = vmatprep.subr.bf16.mxu0 0
    %1705 = vmatpush1.bf16.msra.mxu0 0
    %1706 = vmatprep.mubr.bf16.mxu0 0
    %1707 = vmatmul.mubr.bf16.gmra.mrb[0].mxu0 %v1672
    %v1708 = vpop.f32.mrb[0].mxu0
    %v1709 = vadd.f32 0.0, %v1708
    %v1710 = vpop.f32.mrb[0].mxu0
    %v1711 = vadd.f32 0.0, %v1710
    %v1712 = vpop.f32.mrb[0].mxu0
    %v1713 = vpop.f32.mrb[0].mxu0
    %1714 = vdwg.mxu0
    %v1716 = vsel %vm271, %v1669, 0
    %1718 = vmatprep.subr.bf16.mxu0 %v447
    %1719 = vmatpush1.bf16.msra.mxu0 %v446
    %1720 = vmatprep.subr.bf16.mxu0 %v449
    %1721 = vmatpush1.bf16.msra.mxu0 %v448
    %1722 = vmatprep.subr.bf16.mxu0 %v451
    %1723 = vmatpush1.bf16.msra.mxu0 %v450
    %1724 = vmatprep.subr.bf16.mxu0 %v453
    %1725 = vmatpush1.bf16.msra.mxu0 %v452
    %1726 = vmatprep.subr.bf16.mxu0 0
    %1727 = vmatpush1.bf16.msra.mxu0 0
    %1728 = vmatprep.subr.bf16.mxu0 0
    %1729 = vmatpush1.bf16.msra.mxu0 0
    %1730 = vmatprep.subr.bf16.mxu0 0
    %1731 = vmatpush1.bf16.msra.mxu0 0
    %1732 = vmatprep.subr.bf16.mxu0 0
    %1733 = vmatpush1.bf16.msra.mxu0 0
    %1734 = vmatprep.subr.bf16.mxu0 0
    %1735 = vmatpush1.bf16.msra.mxu0 0
    %1736 = vmatprep.subr.bf16.mxu0 0
    %1737 = vmatpush1.bf16.msra.mxu0 0
    %1738 = vmatprep.subr.bf16.mxu0 0
    %1739 = vmatpush1.bf16.msra.mxu0 0
    %1740 = vmatprep.subr.bf16.mxu0 0
    %1741 = vmatpush1.bf16.msra.mxu0 0
    %1742 = vmatprep.subr.bf16.mxu0 0
    %1743 = vmatpush1.bf16.msra.mxu0 0
    %1744 = vmatprep.subr.bf16.mxu0 0
    %1745 = vmatpush1.bf16.msra.mxu0 0
    %1746 = vmatprep.subr.bf16.mxu0 0
    %1747 = vmatpush1.bf16.msra.mxu0 0
    %1748 = vmatprep.subr.bf16.mxu0 0
    %1749 = vmatpush1.bf16.msra.mxu0 0
    %1750 = vmatprep.mubr.bf16.mxu0 0
    %1751 = vmatmul.mubr.bf16.gmra.mrb[0].mxu0 %v1716
    %v1752 = vpop.f32.mrb[0].mxu0
    %v1753 = vadd.f32 %v1709, %v1752
    %v1754 = vpop.f32.mrb[0].mxu0
    %v1755 = vadd.f32 %v1711, %v1754
    %v1756 = vpop.f32.mrb[0].mxu0
    %v1757 = vpop.f32.mrb[0].mxu0
    %1758 = vdwg.mxu0
    %v1759 = vadd.f32 %v1753, %v224
    %v1760 = vadd.f32 %v1755, %v228
    %v1761 = vxor.u32 %v1759, 2147483648
    %v1762 = vmul.f32 %v1761, 1.442695
    %v1763 = vpow.pop %v1762
    %v1764 = vadd.f32 %v1763, 1.0
    %v1765 = vrcp.pop %v1764
    %v1766 = vmul.f32 1.0, %v1765
    %v1767 = vxor.u32 %v1760, 2147483648
    %v1768 = vmul.f32 %v1767, 1.442695
    %v1769 = vpow.pop %v1768
    %v1770 = vadd.f32 %v1769, 1.0
    %v1771 = vrcp.pop %v1770
    %v1772 = vmul.f32 1.0, %v1771
    %v1773 = vtanh.pop %v1760
    %v1774 = vmul.f32 %v1766, %v1601
    %v1775 = vmul.f32 %v1766, %v1773
    %1777 = vrot.lane.b32.xlu0 %v1775, 64
    %v1778 = vpop.permute.xlu0 %1777
    %v1780 = vadd.f32 %v1774, %v1778
    %v1781 = vtanh.pop %v1780
    %v1782 = vmul.f32 %v1772, %v1781
    %v1783 = vld [vmem:[%s7] sm:$0xff]
    %v1784 = vld [vmem:[%s7 + $0x8] sm:$0xff]
    %v1785 = vld [vmem:[%s7 + $0x10] sm:$0xff]
    %v1786 = vld [vmem:[%s7 + $0x18] sm:$0xff]
    %v1787 = vld [vmem:[%s7 + $0x20] sm:$0xff]
    %v1788 = vld [vmem:[%s7 + $0x28] sm:$0xff]
    %v1789 = vld [vmem:[%s7 + $0x30] sm:$0xff]
    %v1790 = vld [vmem:[%s7 + $0x38] sm:$0xff]
    %v1791 = vld [vmem:[%s8] sm:$0x1]
    %v1793 = vlaneseq
    %v1794 = vshrl.u32 %v1793, 7
    %v1795 = vsub.s32 0, %v1794
    %v1796 = vrot.slane %v1791, %v1795
    %v1799 = vsel %vm271, %v1782, 0
    %1801 = vmatprep.subr.mxu0 0.0
    %1802 = vmatpush1.msra.mxu0 %v1783
    %1803 = vmatprep.subr.mxu0 0.0
    %1804 = vmatpush1.msra.mxu0 %v1784
    %1805 = vmatprep.subr.mxu0 0.0
    %1806 = vmatpush1.msra.mxu0 %v1785
    %1807 = vmatprep.subr.mxu0 0.0
    %1808 = vmatpush1.msra.mxu0 %v1786
    %1809 = vmatprep.subr.mxu0 0.0
    %1810 = vmatpush1.msra.mxu0 %v1787
    %1811 = vmatprep.subr.mxu0 0.0
    %1812 = vmatpush1.msra.mxu0 %v1788
    %1813 = vmatprep.subr.mxu0 0.0
    %1814 = vmatpush1.msra.mxu0 %v1789
    %1815 = vmatprep.subr.mxu0 0.0
    %1816 = vmatpush1.msra.mxu0 %v1790
    %1817 = vmatprep.subr.mxu0 0.0
    %1818 = vmatpush1.msra.mxu0 0.0
    %1819 = vmatprep.subr.mxu0 0.0
    %1820 = vmatpush1.msra.mxu0 0.0
    %1821 = vmatprep.subr.mxu0 0.0
    %1822 = vmatpush1.msra.mxu0 0.0
    %1823 = vmatprep.subr.mxu0 0.0
    %1824 = vmatpush1.msra.mxu0 0.0
    %1825 = vmatprep.subr.mxu0 0.0
    %1826 = vmatpush1.msra.mxu0 0.0
    %1827 = vmatprep.subr.mxu0 0.0
    %1828 = vmatpush1.msra.mxu0 0.0
    %1829 = vmatprep.subr.mxu0 0.0
    %1830 = vmatpush1.msra.mxu0 0.0
    %1831 = vmatprep.subr.mxu0 0.0
    %1832 = vmatpush1.msra.mxu0 0.0
    %1833 = vmatprep.subr.mxu0 0.0
    %1834 = vmatpush1.msra.mxu0 0.0
    %1835 = vmatprep.subr.mxu0 0.0
    %1836 = vmatpush1.msra.mxu0 0.0
    %1837 = vmatprep.subr.mxu0 0.0
    %1838 = vmatpush1.msra.mxu0 0.0
    %1839 = vmatprep.subr.mxu0 0.0
    %1840 = vmatpush1.msra.mxu0 0.0
    %1841 = vmatprep.subr.mxu0 0.0
    %1842 = vmatpush1.msra.mxu0 0.0
    %1843 = vmatprep.subr.mxu0 0.0
    %1844 = vmatpush1.msra.mxu0 0.0
    %1845 = vmatprep.subr.mxu0 0.0
    %1846 = vmatpush1.msra.mxu0 0.0
    %1847 = vmatprep.subr.mxu0 0.0
    %1848 = vmatpush1.msra.mxu0 0.0
    %1849 = vmatprep.subr.mxu0 0.0
    %1850 = vmatpush1.msra.mxu0 0.0
    %1851 = vmatprep.subr.mxu0 0.0
    %1852 = vmatpush1.msra.mxu0 0.0
    %1853 = vmatprep.subr.mxu0 0.0
    %1854 = vmatpush1.msra.mxu0 0.0
    %1855 = vmatprep.subr.mxu0 0.0
    %1856 = vmatpush1.msra.mxu0 0.0
    %1857 = vmatprep.subr.mxu0 0.0
    %1858 = vmatpush1.msra.mxu0 0.0
    %1859 = vmatprep.subr.mxu0 0.0
    %1860 = vmatpush1.msra.mxu0 0.0
    %1861 = vmatprep.subr.mxu0 0.0
    %1862 = vmatpush1.msra.mxu0 0.0
    %1863 = vmatprep.subr.mxu0 0.0
    %1864 = vmatpush1.msra.mxu0 0.0
    %1865 = vmatprep.mubr.f32.mxu0 0.0
    %1866 = vmatmul.mubr.f32.gmra.mrb[0].mxu0 %v1799
    %v1867 = vpop.f32.mrb[0].mxu0
    %v1868 = vadd.f32 %v1796, %v1867
    %v1869 = vpop.f32.mrb[0].mxu0
    %1870 = vdwg.mxu0
    %v1871 = vmax.f32 %v1868, 0.0
    %v1872 = vld [vmem:[%s9] sm:$0xff]
    %v1873 = vld [vmem:[%s9 + $0x8] sm:$0xff]
    %v1874 = vld [vmem:[%s10] sm:$0x1]
    %v1876 = vlaneseq
    %v1877 = vshrl.u32 %v1876, 7
    %v1878 = vsub.s32 0, %v1877
    %v1879 = vrot.slane %v1874, %v1878
    %vm1881 = vcmask 130048
    %v1883 = vsel %vm1881, %v1871, 0
    %1885 = vmatprep.subr.mxu0 0.0
    %1886 = vmatpush1.msra.mxu0 %v1872
    %1887 = vmatprep.subr.mxu0 0.0
    %1888 = vmatpush1.msra.mxu0 %v1873
    %1889 = vmatprep.subr.mxu0 0.0
    %1890 = vmatpush1.msra.mxu0 0.0
    %1891 = vmatprep.subr.mxu0 0.0
    %1892 = vmatpush1.msra.mxu0 0.0
    %1893 = vmatprep.subr.mxu0 0.0
    %1894 = vmatpush1.msra.mxu0 0.0
    %1895 = vmatprep.subr.mxu0 0.0
    %1896 = vmatpush1.msra.mxu0 0.0
    %1897 = vmatprep.subr.mxu0 0.0
    %1898 = vmatpush1.msra.mxu0 0.0
    %1899 = vmatprep.subr.mxu0 0.0
    %1900 = vmatpush1.msra.mxu0 0.0
    %1901 = vmatprep.subr.mxu0 0.0
    %1902 = vmatpush1.msra.mxu0 0.0
    %1903 = vmatprep.subr.mxu0 0.0
    %1904 = vmatpush1.msra.mxu0 0.0
    %1905 = vmatprep.subr.mxu0 0.0
    %1906 = vmatpush1.msra.mxu0 0.0
    %1907 = vmatprep.subr.mxu0 0.0
    %1908 = vmatpush1.msra.mxu0 0.0
    %1909 = vmatprep.subr.mxu0 0.0
    %1910 = vmatpush1.msra.mxu0 0.0
    %1911 = vmatprep.subr.mxu0 0.0
    %1912 = vmatpush1.msra.mxu0 0.0
    %1913 = vmatprep.subr.mxu0 0.0
    %1914 = vmatpush1.msra.mxu0 0.0
    %1915 = vmatprep.subr.mxu0 0.0
    %1916 = vmatpush1.msra.mxu0 0.0
    %1917 = vmatprep.subr.mxu0 0.0
    %1918 = vmatpush1.msra.mxu0 0.0
    %1919 = vmatprep.subr.mxu0 0.0
    %1920 = vmatpush1.msra.mxu0 0.0
    %1921 = vmatprep.subr.mxu0 0.0
    %1922 = vmatpush1.msra.mxu0 0.0
    %1923 = vmatprep.subr.mxu0 0.0
    %1924 = vmatpush1.msra.mxu0 0.0
    %1925 = vmatprep.subr.mxu0 0.0
    %1926 = vmatpush1.msra.mxu0 0.0
    %1927 = vmatprep.subr.mxu0 0.0
    %1928 = vmatpush1.msra.mxu0 0.0
    %1929 = vmatprep.subr.mxu0 0.0
    %1930 = vmatpush1.msra.mxu0 0.0
    %1931 = vmatprep.subr.mxu0 0.0
    %1932 = vmatpush1.msra.mxu0 0.0
    %1933 = vmatprep.subr.mxu0 0.0
    %1934 = vmatpush1.msra.mxu0 0.0
    %1935 = vmatprep.subr.mxu0 0.0
    %1936 = vmatpush1.msra.mxu0 0.0
    %1937 = vmatprep.subr.mxu0 0.0
    %1938 = vmatpush1.msra.mxu0 0.0
    %1939 = vmatprep.subr.mxu0 0.0
    %1940 = vmatpush1.msra.mxu0 0.0
    %1941 = vmatprep.subr.mxu0 0.0
    %1942 = vmatpush1.msra.mxu0 0.0
    %1943 = vmatprep.subr.mxu0 0.0
    %1944 = vmatpush1.msra.mxu0 0.0
    %1945 = vmatprep.subr.mxu0 0.0
    %1946 = vmatpush1.msra.mxu0 0.0
    %1947 = vmatprep.subr.mxu0 0.0
    %1948 = vmatpush1.msra.mxu0 0.0
    %1949 = vmatprep.mubr.f32.mxu0 0.0
    %1950 = vmatmul.mubr.f32.gmra.mrb[0].mxu0 %v1883
    %v1951 = vpop.f32.mrb[0].mxu0
    %v1952 = vadd.f32 %v1879, %v1951
    %v1953 = vpop.f32.mrb[0].mxu0
    %1954 = vdwg.mxu0
    %1955 = vst [vmem:[%s11] sm:$0xff] %v1952
    // Predicated region
    $region54: #{ts_rnn_forward.1} parent=1 // pred_check
      _
    $region55: #{ts_rnn_forward.1} parent=1 // pred_check_branch
      %1957 = sbr.rel (0) target = $region57
    $region56: #{ts_rnn_forward.1} parent=1 // pred_region
      _
    $region57: #{ts_rnn_forward.1} parent=1 // pred_fallthru
      _
    // Predicated region
    $region58: #{ts_rnn_forward.1} parent=1 // pred_check
      _
    $region59: #{ts_rnn_forward.1} parent=1 // pred_check_branch
      %1959 = sbr.rel (0) target = $region61
    $region60: #{ts_rnn_forward.1} parent=1 // pred_region
      _
    $region61: #{ts_rnn_forward.1} parent=1 // pred_fallthru
      _
    %1960 = vsyncpa [#allocation3], 1
    %1961 = vsyncpa [#allocation5], 1

</llo_original>
